<compile_context>
chip_gen: v6e
topology: v6e:2x2x1
jax: 0.10.0
libtpu: 0.0.40
codegen_flags: <defaults>
</compile_context>

<pallas_src>
import functools

import jax
import jax.numpy as jnp
from jax import lax
from jax.experimental import pallas as pl
from jax.experimental.pallas import tpu as pltpu

HIDDEN = 64                 # logical hidden width (PyTorch Linear(..., 64))
H_PAD = 128                 # lane-padded hidden width
MAX_ACTIONS = 128           # weight-padding ceiling for the action dim
SUBLANE = 8
DEFAULT_BATCH_TILE = 2048   # ~9 MiB VMEM at f32; fits v5e's 16 MiB scoped default
MATMUL_PRECISION = lax.Precision.HIGHEST


def _round_up(n, m):
    return ((n + m - 1) // m) * m


def qnet_kernel(x_ref, w1_ref, b1_ref, w2_ref, b2_ref, w3_ref, b3_ref,
                *out_refs, num_actions, emit_q):
    """One batch tile: 3 MXU matmuls + EUP tanh + fused greedy-action argmax."""
    x = x_ref[...]                                                    # (TB, S) f32

    h1 = jnp.dot(x, w1_ref[...], preferred_element_type=jnp.float32,
                 precision=MATMUL_PRECISION)
    h1 = jnp.tanh(h1 + b1_ref[...])                                   # (TB, 128)

    h2 = jnp.dot(h1, w2_ref[...], preferred_element_type=jnp.float32,
                 precision=MATMUL_PRECISION)
    h2 = jnp.tanh(h2 + b2_ref[...])                                   # (TB, 128)

    q = jnp.dot(h2, w3_ref[...], preferred_element_type=jnp.float32,
                precision=MATMUL_PRECISION)
    q = q + b3_ref[...]                                               # (TB, 128)

    if emit_q:
        q_ref, act_ref = out_refs
        # Narrow writeback: only the valid action columns leave the chip.
        q_ref[...] = q[:, :num_actions].astype(q_ref.dtype)           # (TB, A)
    else:
        (act_ref,) = out_refs

    # Fused Qnet.act(): greedy action over the *valid* columns only.
    # (Padded columns carry garbage-free zeros from the padded weights; mask
    #  them with -inf before the max.  Tie-break = first index of max.)
    col = lax.broadcasted_iota(jnp.int32, q.shape, 1)
    q_valid = jnp.where(col < num_actions, q, -jnp.inf)
    row_max = jnp.max(q_valid, axis=-1, keepdims=True)
    first_max = jnp.min(jnp.where(q_valid >= row_max, col, MAX_ACTIONS),
                        axis=-1, keepdims=True)
    act_ref[...] = first_max.astype(jnp.int32)                        # (TB, 1)


def pad_qnet_params(params, num_actions):
    """Zero-pad logical (in,out)-layout params to lane-dense (…,128) tiles."""
    assert 0 < num_actions <= MAX_ACTIONS, "num_actions must be in (0, 128]"
    S = params["w1"].shape[0]
    z = lambda shape: jnp.zeros(shape, jnp.float32)
    return {
        "w1": z((S, H_PAD)).at[:, :HIDDEN].set(params["w1"]),
        "b1": z((1, H_PAD)).at[:, :HIDDEN].set(params["b1"]),
        "w2": z((H_PAD, H_PAD)).at[:HIDDEN, :HIDDEN].set(params["w2"]),
        "b2": z((1, H_PAD)).at[:, :HIDDEN].set(params["b2"]),
        "w3": z((H_PAD, MAX_ACTIONS)).at[:HIDDEN, :num_actions].set(params["w3"]),
        "b3": z((1, MAX_ACTIONS)).at[:, :num_actions].set(params["b3"]),
    }


def _choose_tiling(B, max_batch_tile):
    """Pick (batch_tile, padded_batch).  Ensures >=2 grid steps for v7x's two
    TensorCores once the batch is large enough to be worth splitting."""
    b_min = _round_up(max(B, 1), SUBLANE)
    tb = min(max_batch_tile, b_min)
    if tb == b_min and b_min >= 256:           # whole batch fits one tile: split it
        tb = _round_up((b_min + 1) // 2, SUBLANE)
    b_pad = _round_up(b_min, tb)
    return tb, b_pad


def qnet_forward(x, padded_params, num_actions, *,
                 max_batch_tile=DEFAULT_BATCH_TILE, return_q=True):
    """x: (B, num_states) f32.

    return_q=True  -> (q_values (B, A) f32, greedy_actions (B,) i32)
    return_q=False -> greedy_actions (B,) i32   (act()/rollout path: no Q writeback)
    """
    assert 0 < num_actions <= MAX_ACTIONS
    w1, b1, w2, b2, w3, b3 = (padded_params[k]
                              for k in ("w1", "b1", "w2", "b2", "w3", "b3"))
    B, S = x.shape

    tb, b_pad = _choose_tiling(B, max_batch_tile)
    if b_pad != B:
        x = jnp.pad(x, ((0, b_pad - B), (0, 0)))

    grid = (b_pad // tb,)
    kernel = functools.partial(qnet_kernel, num_actions=num_actions,
                               emit_q=return_q)

    in_specs = [
        pl.BlockSpec((tb, S), lambda i: (i, 0)),               # streamed activations
        pl.BlockSpec((S, H_PAD), lambda i: (0, 0)),            # weights: VMEM-resident
        pl.BlockSpec((1, H_PAD), lambda i: (0, 0)),
        pl.BlockSpec((H_PAD, H_PAD), lambda i: (0, 0)),
        pl.BlockSpec((1, H_PAD), lambda i: (0, 0)),
        pl.BlockSpec((H_PAD, MAX_ACTIONS), lambda i: (0, 0)),
        pl.BlockSpec((1, MAX_ACTIONS), lambda i: (0, 0)),
    ]

    act_spec = pl.BlockSpec((tb, 1), lambda i: (i, 0))
    act_shape = jax.ShapeDtypeStruct((b_pad, 1), jnp.int32)

    if return_q:
        out_specs = [pl.BlockSpec((tb, num_actions), lambda i: (i, 0)),  # narrow Q
                     act_spec]
        out_shape = (jax.ShapeDtypeStruct((b_pad, num_actions), jnp.float32),
                     act_shape)
    else:
        out_specs = act_spec
        out_shape = act_shape

    outs = pl.pallas_call(
        kernel,
        grid=grid,
        in_specs=in_specs,
        out_specs=out_specs,
        out_shape=out_shape,
        compiler_params=pltpu.CompilerParams(
            dimension_semantics=("parallel",),        # shards across TCs on v7x
            vmem_limit_bytes=32 * 1024 * 1024,
        ),
    )(x, w1, b1, w2, b2, w3, b3)

    if return_q:
        q_pad, act_pad = outs
        return q_pad[:B], act_pad[:B, 0]
    return outs[:B, 0]


def qnet_act(obs, padded_params, num_actions):
    """Qnet.act(): observation(s) -> greedy action(s), no Q-value writeback."""
    obs = jnp.asarray(obs, jnp.float32)
    if obs.ndim == 1:
        obs = obs[None, :]
    return qnet_forward(obs, padded_params, num_actions, return_q=False)


def init_qnet_params(key, num_states, num_actions, hidden=HIDDEN):
    """Deterministic synthetic init (uniform, PyTorch-Linear-like bounds)."""
    ks = jax.random.split(key, 6)

    def uni(k, shape, fan_in):
        bound = 1.0 / jnp.sqrt(fan_in)
        return jax.random.uniform(k, shape, jnp.float32, -bound, bound)

    # Stored as (in, out) -> transposed relative to PyTorch's (out, in).
    return {
        "w1": uni(ks[0], (num_states, hidden), num_states),
        "b1": uni(ks[1], (1, hidden), num_states),
        "w2": uni(ks[2], (hidden, hidden), hidden),
        "b2": uni(ks[3], (1, hidden), hidden),
        "w3": uni(ks[4], (hidden, num_actions), hidden),
        "b3": uni(ks[5], (1, num_actions), hidden),
    }


def qnet_reference(x, params):
    """Pure-JAX reference (unpadded) for correctness checking."""
    h1 = jnp.tanh(x @ params["w1"] + params["b1"])
    h2 = jnp.tanh(h1 @ params["w2"] + params["b2"])
    return h2 @ params["w3"] + params["b3"]


if __name__ == "__main__":
    key = jax.random.PRNGKey(0)
    k_param, k_x, k_x2 = jax.random.split(key, 3)

    num_states = 8      # observation dim
    num_actions = 4     # discrete action count
    batch = 2

    params = init_qnet_params(k_param, num_states, num_actions)
    padded = pad_qnet_params(params, num_actions)

    # --- small forward batch ---------------------------------------------
    x = jax.random.normal(k_x, (batch, num_states), jnp.float32)
    q_values, actions = jax.block_until_ready(
        qnet_forward(x, padded, num_actions))

    ref_q = qnet_reference(x, params)
    assert q_values.shape == (batch, num_actions)
    assert jnp.allclose(q_values, ref_q, atol=1e-5, rtol=1e-4)
    assert jnp.array_equal(actions, jnp.argmax(ref_q, axis=1).astype(jnp.int32))

    # --- act()-only path: no Q writeback ----------------------------------
    act_only = jax.block_until_ready(qnet_act(x[0], padded, num_actions))
    assert int(act_only[0]) == int(jnp.argmax(ref_q[0]))

    # --- larger (replay-style) batch: exercises the batch grid + padding --
    big_batch = 300
    x_big = jax.random.normal(k_x2, (big_batch, num_states), jnp.float32)
    q_big, act_big = jax.block_until_ready(
        qnet_forward(x_big, padded, num_actions, max_batch_tile=128))

    ref_big = qnet_reference(x_big, params)
    assert q_big.shape == (big_batch, num_actions)
    assert jnp.allclose(q_big, ref_big, atol=1e-5, rtol=1e-4)
    assert jnp.array_equal(act_big, jnp.argmax(ref_big, axis=1).astype(jnp.int32))

    # --- single-tile-sized batch: exercises the v7x two-step split --------
    x_mid = jax.random.normal(k_x2, (512, num_states), jnp.float32)
    q_mid, act_mid = jax.block_until_ready(qnet_forward(x_mid, padded, num_actions))
    ref_mid = qnet_reference(x_mid, params)
    assert jnp.allclose(q_mid, ref_mid, atol=1e-5, rtol=1e-4)
    assert jnp.array_equal(act_mid, jnp.argmax(ref_mid, axis=1).astype(jnp.int32))

    print("KERNEL_OK")
</pallas_src>

<mosaic_0001>
module attributes {stable_mosaic.version = 11 : i64} {
  func.func @qnet_kernel(%arg0: i32, %arg1: memref<8x8xf32, #tpu.memory_space<vmem>>, %arg2: memref<8x128xf32, #tpu.memory_space<vmem>>, %arg3: memref<1x128xf32, #tpu.memory_space<vmem>>, %arg4: memref<128x128xf32, #tpu.memory_space<vmem>>, %arg5: memref<1x128xf32, #tpu.memory_space<vmem>>, %arg6: memref<128x128xf32, #tpu.memory_space<vmem>>, %arg7: memref<1x128xf32, #tpu.memory_space<vmem>>, %arg8: memref<8x4xf32, #tpu.memory_space<vmem>>, %arg9: memref<8x1xi32, #tpu.memory_space<vmem>>) attributes {dimension_semantics = [#tpu.dimension_semantics<parallel>], iteration_bounds = array<i64: 1>, scalar_prefetch = 0 : i64, scratch_operands = 0 : i64, tpu.core_type = #tpu.core_type<tc>, window_params = [{transform_indices = @transform_0, window_bounds = array<i64: 8, 8>}, {pipeline_mode = #tpu.pipeline_mode<synchronous>, transform_indices = @transform_1, window_bounds = array<i64: 8, 128>}, {pipeline_mode = #tpu.pipeline_mode<synchronous>, transform_indices = @transform_2, window_bounds = array<i64: 1, 128>}, {pipeline_mode = #tpu.pipeline_mode<synchronous>, transform_indices = @transform_3, window_bounds = array<i64: 128, 128>}, {pipeline_mode = #tpu.pipeline_mode<synchronous>, transform_indices = @transform_4, window_bounds = array<i64: 1, 128>}, {pipeline_mode = #tpu.pipeline_mode<synchronous>, transform_indices = @transform_5, window_bounds = array<i64: 128, 128>}, {pipeline_mode = #tpu.pipeline_mode<synchronous>, transform_indices = @transform_6, window_bounds = array<i64: 1, 128>}, {transform_indices = @transform_7, window_bounds = array<i64: 8, 4>}, {transform_indices = @transform_8, window_bounds = array<i64: 8, 1>}]} {
    %c0 = arith.constant 0 : index
    %c0_0 = arith.constant 0 : index
    %0 = vector.load %arg1[%c0, %c0_0] : memref<8x8xf32, #tpu.memory_space<vmem>>, vector<8x8xf32>
    %c0_1 = arith.constant 0 : index
    %c0_2 = arith.constant 0 : index
    %1 = vector.load %arg2[%c0_1, %c0_2] : memref<8x128xf32, #tpu.memory_space<vmem>>, vector<8x128xf32>
    %cst = arith.constant dense<0.000000e+00> : vector<8x128xf32>
    %2 = tpu.matmul %0, %1, %cst {dimension_numbers = #tpu.dot_dimension_numbers<[1], [0], [0], [1], [0, 0, 1, 1], [], []>, precision = #tpu.contract_precision<fp32>} : vector<8x8xf32>, vector<8x128xf32>, vector<8x128xf32> -> vector<8x128xf32>
    %c0_3 = arith.constant 0 : index
    %c0_4 = arith.constant 0 : index
    %3 = vector.load %arg3[%c0_3, %c0_4] : memref<1x128xf32, #tpu.memory_space<vmem>>, vector<1x128xf32>
    %4 = vector.broadcast %3 : vector<1x128xf32> to vector<8x128xf32>
    %5 = arith.addf %2, %4 : vector<8x128xf32>
    %6 = math.tanh %5 : vector<8x128xf32>
    %c0_5 = arith.constant 0 : index
    %c0_6 = arith.constant 0 : index
    %7 = vector.load %arg4[%c0_5, %c0_6] : memref<128x128xf32, #tpu.memory_space<vmem>>, vector<128x128xf32>
    %cst_7 = arith.constant dense<0.000000e+00> : vector<8x128xf32>
    %8 = tpu.matmul %6, %7, %cst_7 {dimension_numbers = #tpu.dot_dimension_numbers<[1], [0], [0], [1], [0, 0, 1, 1], [], []>, precision = #tpu.contract_precision<fp32>} : vector<8x128xf32>, vector<128x128xf32>, vector<8x128xf32> -> vector<8x128xf32>
    %c0_8 = arith.constant 0 : index
    %c0_9 = arith.constant 0 : index
    %9 = vector.load %arg5[%c0_8, %c0_9] : memref<1x128xf32, #tpu.memory_space<vmem>>, vector<1x128xf32>
    %10 = vector.broadcast %9 : vector<1x128xf32> to vector<8x128xf32>
    %11 = arith.addf %8, %10 : vector<8x128xf32>
    %12 = math.tanh %11 : vector<8x128xf32>
    %c0_10 = arith.constant 0 : index
    %c0_11 = arith.constant 0 : index
    %13 = vector.load %arg6[%c0_10, %c0_11] : memref<128x128xf32, #tpu.memory_space<vmem>>, vector<128x128xf32>
    %cst_12 = arith.constant dense<0.000000e+00> : vector<8x128xf32>
    %14 = tpu.matmul %12, %13, %cst_12 {dimension_numbers = #tpu.dot_dimension_numbers<[1], [0], [0], [1], [0, 0, 1, 1], [], []>, precision = #tpu.contract_precision<fp32>} : vector<8x128xf32>, vector<128x128xf32>, vector<8x128xf32> -> vector<8x128xf32>
    %c0_13 = arith.constant 0 : index
    %c0_14 = arith.constant 0 : index
    %15 = vector.load %arg7[%c0_13, %c0_14] : memref<1x128xf32, #tpu.memory_space<vmem>>, vector<1x128xf32>
    %16 = vector.broadcast %15 : vector<1x128xf32> to vector<8x128xf32>
    %17 = arith.addf %14, %16 : vector<8x128xf32>
    %18 = vector.extract_strided_slice %17 {offsets = [0, 0], sizes = [8, 4], strides = [1, 1]} : vector<8x128xf32> to vector<8x4xf32>
    %c0_15 = arith.constant 0 : index
    %c0_16 = arith.constant 0 : index
    %19 = vector.load %arg8[%c0_15, %c0_16] : memref<8x4xf32, #tpu.memory_space<vmem>>, vector<8x4xf32>
    tpu.vector_store %arg8[%c0_15, %c0_16], %18 {strides = array<i32>} : memref<8x4xf32, #tpu.memory_space<vmem>>, vector<8x4xf32>,
    %20 = tpu.iota {dimensions = array<i32: 1>} : vector<8x128xi32>
    %c4_i32 = arith.constant 4 : i32
    %21 = vector.broadcast %c4_i32 : i32 to vector<8x128xi32>
    %22 = arith.cmpi slt, %20, %21 : vector<8x128xi32>
    %cst_17 = arith.constant 0xFF800000 : f32
    %23 = vector.broadcast %cst_17 : f32 to vector<8x128xf32>
    %24 = arith.select %22, %17, %23 : vector<8x128xi1>, vector<8x128xf32>
    %cst_18 = arith.constant dense<0xFF800000> : vector<8xf32>
    %25 = vector.multi_reduction <maximumf>, %24, %cst_18 [1] : vector<8x128xf32> to vector<8xf32>
    %26 = vector.shape_cast %25 : vector<8xf32> to vector<8x1xf32>
    %27 = vector.broadcast %26 : vector<8x1xf32> to vector<8x128xf32>
    %28 = arith.cmpf oge, %24, %27 : vector<8x128xf32>
    %c128_i32 = arith.constant 128 : i32
    %29 = vector.broadcast %c128_i32 : i32 to vector<8x128xi32>
    %30 = arith.select %28, %20, %29 : vector<8x128xi1>, vector<8x128xi32>
    %cst_19 = arith.constant dense<2147483647> : vector<8xi32>
    %31 = vector.multi_reduction <minsi>, %30, %cst_19 [1] : vector<8x128xi32> to vector<8xi32>
    %32 = vector.shape_cast %31 : vector<8xi32> to vector<8x1xi32>
    %c0_20 = arith.constant 0 : index
    %c0_21 = arith.constant 0 : index
    %33 = vector.load %arg9[%c0_20, %c0_21] : memref<8x1xi32, #tpu.memory_space<vmem>>, vector<8x1xi32>
    tpu.vector_store %arg9[%c0_20, %c0_21], %32 {strides = array<i32>} : memref<8x1xi32, #tpu.memory_space<vmem>>, vector<8x1xi32>,
    return
  }
  func.func @transform_0(%arg0: i32) -> (i32, i32) {
    %c0_i32 = arith.constant 0 : i32
    %c0_i32_0 = arith.constant 0 : i32
    return %arg0, %c0_i32 : i32, i32
  }
  func.func @transform_1(%arg0: i32) -> (i32, i32) {
    %c0_i32 = arith.constant 0 : i32
    %c0_i32_0 = arith.constant 0 : i32
    %c0_i32_1 = arith.constant 0 : i32
    return %c0_i32, %c0_i32_0 : i32, i32
  }
  func.func @transform_2(%arg0: i32) -> (i32, i32) {
    %c0_i32 = arith.constant 0 : i32
    %c0_i32_0 = arith.constant 0 : i32
    %c0_i32_1 = arith.constant 0 : i32
    return %c0_i32, %c0_i32_0 : i32, i32
  }
  func.func @transform_3(%arg0: i32) -> (i32, i32) {
    %c0_i32 = arith.constant 0 : i32
    %c0_i32_0 = arith.constant 0 : i32
    %c0_i32_1 = arith.constant 0 : i32
    return %c0_i32, %c0_i32_0 : i32, i32
  }
  func.func @transform_4(%arg0: i32) -> (i32, i32) {
    %c0_i32 = arith.constant 0 : i32
    %c0_i32_0 = arith.constant 0 : i32
    %c0_i32_1 = arith.constant 0 : i32
    return %c0_i32, %c0_i32_0 : i32, i32
  }
  func.func @transform_5(%arg0: i32) -> (i32, i32) {
    %c0_i32 = arith.constant 0 : i32
    %c0_i32_0 = arith.constant 0 : i32
    %c0_i32_1 = arith.constant 0 : i32
    return %c0_i32, %c0_i32_0 : i32, i32
  }
  func.func @transform_6(%arg0: i32) -> (i32, i32) {
    %c0_i32 = arith.constant 0 : i32
    %c0_i32_0 = arith.constant 0 : i32
    %c0_i32_1 = arith.constant 0 : i32
    return %c0_i32, %c0_i32_0 : i32, i32
  }
  func.func @transform_7(%arg0: i32) -> (i32, i32) {
    %c0_i32 = arith.constant 0 : i32
    %c0_i32_0 = arith.constant 0 : i32
    return %arg0, %c0_i32 : i32, i32
  }
  func.func @transform_8(%arg0: i32) -> (i32, i32) {
    %c0_i32 = arith.constant 0 : i32
    %c0_i32_0 = arith.constant 0 : i32
    return %arg0, %c0_i32 : i32, i32
  }
}

</mosaic_0001>

<llo_original>
// kernel: tpu_custom_call.1
$region0: #{tpu_custom_call.1}
  #allocation0 [shape = 'u32[]', space=smem, size = 0x4, offset = 0x4, fixed_abs, tag = 'smem constant byte address 0x4 - core index']
  #allocation1 [shape = 'u32[144,128]{1,0:T(1,128)}', space=vmem, size = 0x12000, scoped, tag = 'internal scratch']
  %s0 = inlined_call_operand.hbm [shape: f32[8,8], index: 0, kind: input, shape index: {}]
  %s1 = inlined_call_operand.hbm [shape: f32[8,128], index: 1, kind: input, shape index: {}]
  %s2 = inlined_call_operand.vmem [shape: f32[1,128], index: 2, kind: input, shape index: {}]
  %s3 = inlined_call_operand.hbm [shape: f32[128,128], index: 3, kind: input, shape index: {}]
  %s4 = inlined_call_operand.vmem [shape: f32[1,128], index: 4, kind: input, shape index: {}]
  %s5 = inlined_call_operand.hbm [shape: f32[128,128], index: 5, kind: input, shape index: {}]
  %s6 = inlined_call_operand.vmem [shape: f32[1,128], index: 6, kind: input, shape index: {}]
  %s7 = inlined_call_operand.vmem [shape: f32[8,4], index: 7, kind: output, shape index: {0}]
  %s8 = inlined_call_operand.vmem [shape: s32[8,1], index: 8, kind: output, shape index: {1}]
  %9 = xla_tuple %s7, %s8
  %s10 = sld [smem:[#allocation0]]
  $region62: #{tpu_custom_call.1} parent=0
    _
  %s12 = ssub.s32 1, %s10
  %s13 = scalar_select 0, %s12, %s10
  $region1: #{tpu_custom_call.1} parent=0
    #allocation2 [shape = 'u8[4096]{0}', space=vmem, size = 0x1000, scoped, tag = 'input window, operand 0, single buffered']
    #allocation3 [shape = 's32[1]{0}', space=sflag, size = 0x4, scoped, tag = 'scoped memory for tpu_custom_call.1']
    #allocation4 [shape = 'u8[4096]{0}', space=vmem, size = 0x1000, scoped, tag = 'input window, operand 1, single buffered']
    #allocation5 [shape = 's32[1]{0}', space=sflag, size = 0x4, scoped, tag = 'scoped memory for tpu_custom_call.1']
    #allocation6 [shape = 'u8[65536]{0}', space=vmem, size = 0x10000, scoped, tag = 'input window, operand 3, single buffered']
    #allocation7 [shape = 'u8[65536]{0}', space=vmem, size = 0x10000, scoped, tag = 'input window, operand 5, single buffered']
    #allocation8 [shape = 's32[1]{0}', space=sflag, size = 0x4, scoped, tag = 'scoped memory for tpu_custom_call.1']
    %14 = vsyncpa [#allocation3], 0
    %15 = vsyncpa [#allocation5], 0
    %16 = vsyncpa [#allocation8], 0
    // Predicated region
    $region2: #{tpu_custom_call.1} parent=1 // pred_check
      _
    $region3: #{tpu_custom_call.1} parent=1 // pred_check_branch
      %18 = sbr.rel (0) target = $region5
    $region4: #{tpu_custom_call.1} parent=1 // pred_region
      %s20 = ssub.s32 128, 128
      %21 = vsyncadd [#allocation3], %s20
      %s23 = sshll.u32 [#allocation2], 4
      %s24 = int_to_ptr.vmem [resolvable:$true] %s23
      %26 = dma.hbm_to_vmem [thread:$0]  %s0, 128, %s24, [#allocation3]
    $region5: #{tpu_custom_call.1} parent=1 // pred_fallthru
      _
    // Predicated region
    $region6: #{tpu_custom_call.1} parent=1 // pred_check
      _
    $region7: #{tpu_custom_call.1} parent=1 // pred_check_branch
      %28 = sbr.rel (0) target = $region9
    $region8: #{tpu_custom_call.1} parent=1 // pred_region
      %s30 = ssub.s32 128, 128
      %31 = vsyncadd [#allocation5], %s30
      %s33 = sshll.u32 [#allocation4], 4
      %s34 = int_to_ptr.vmem [resolvable:$true] %s33
      %36 = dma.hbm_to_vmem [thread:$0]  %s1, 128, %s34, [#allocation5]
    $region9: #{tpu_custom_call.1} parent=1 // pred_fallthru
      _
    // Predicated region
    $region10: #{tpu_custom_call.1} parent=1 // pred_check
      _
    $region11: #{tpu_custom_call.1} parent=1 // pred_check_branch
      %38 = sbr.rel (0) target = $region13
    $region12: #{tpu_custom_call.1} parent=1 // pred_region
      _
    $region13: #{tpu_custom_call.1} parent=1 // pred_fallthru
      _
    // Predicated region
    $region14: #{tpu_custom_call.1} parent=1 // pred_check
      _
    $region15: #{tpu_custom_call.1} parent=1 // pred_check_branch
      %40 = sbr.rel (0) target = $region17
    $region16: #{tpu_custom_call.1} parent=1 // pred_region
      %s42 = ssub.s32 2048, 2048
      %43 = vsyncadd [#allocation5], %s42
      %s44 = sshll.u32 [#allocation6], 4
      %s45 = int_to_ptr.vmem [resolvable:$true] %s44
      %50 = dma.hbm_to_vmem [thread:$0]  %s3, 2048, %s45, [#allocation5], 128, 128, 8
    $region17: #{tpu_custom_call.1} parent=1 // pred_fallthru
      _
    // Predicated region
    $region18: #{tpu_custom_call.1} parent=1 // pred_check
      _
    $region19: #{tpu_custom_call.1} parent=1 // pred_check_branch
      %52 = sbr.rel (0) target = $region21
    $region20: #{tpu_custom_call.1} parent=1 // pred_region
      _
    $region21: #{tpu_custom_call.1} parent=1 // pred_fallthru
      _
    // Predicated region
    $region22: #{tpu_custom_call.1} parent=1 // pred_check
      _
    $region23: #{tpu_custom_call.1} parent=1 // pred_check_branch
      %54 = sbr.rel (0) target = $region25
    $region24: #{tpu_custom_call.1} parent=1 // pred_region
      %s56 = ssub.s32 2048, 2048
      %57 = vsyncadd [#allocation8], %s56
      %s58 = sshll.u32 [#allocation7], 4
      %s59 = int_to_ptr.vmem [resolvable:$true] %s58
      %64 = dma.hbm_to_vmem [thread:$0]  %s5, 2048, %s59, [#allocation8], 128, 128, 8
    $region25: #{tpu_custom_call.1} parent=1 // pred_fallthru
      _
    // Predicated region
    $region26: #{tpu_custom_call.1} parent=1 // pred_check
      _
    $region27: #{tpu_custom_call.1} parent=1 // pred_check_branch
      %66 = sbr.rel (0) target = $region29
    $region28: #{tpu_custom_call.1} parent=1 // pred_region
      _
    $region29: #{tpu_custom_call.1} parent=1 // pred_fallthru
      _
    // Predicated region
    $region30: #{tpu_custom_call.1} parent=1 // pred_check
      _
    $region31: #{tpu_custom_call.1} parent=1 // pred_check_branch
      %68 = sbr.rel (0) target = $region33
    $region32: #{tpu_custom_call.1} parent=1 // pred_region
      %69 = dma.done [#allocation3], 128
    $region33: #{tpu_custom_call.1} parent=1 // pred_fallthru
      _
    // Predicated region
    $region34: #{tpu_custom_call.1} parent=1 // pred_check
      _
    $region35: #{tpu_custom_call.1} parent=1 // pred_check_branch
      %71 = sbr.rel (0) target = $region37
    $region36: #{tpu_custom_call.1} parent=1 // pred_region
      %72 = dma.done [#allocation5], 128
    $region37: #{tpu_custom_call.1} parent=1 // pred_fallthru
      _
    // Predicated region
    $region38: #{tpu_custom_call.1} parent=1 // pred_check
      _
    $region39: #{tpu_custom_call.1} parent=1 // pred_check_branch
      %74 = sbr.rel (0) target = $region41
    $region40: #{tpu_custom_call.1} parent=1 // pred_region
      %75 = dma.done [#allocation5], 2048
    $region41: #{tpu_custom_call.1} parent=1 // pred_fallthru
      _
    // Predicated region
    $region42: #{tpu_custom_call.1} parent=1 // pred_check
      _
    $region43: #{tpu_custom_call.1} parent=1 // pred_check_branch
      %77 = sbr.rel (0) target = $region45
    $region44: #{tpu_custom_call.1} parent=1 // pred_region
      %78 = dma.done [#allocation8], 2048
    $region45: #{tpu_custom_call.1} parent=1 // pred_fallthru
      _
    %v79 = vld [vmem:[#allocation2] sm:$0xff]
    %v80 = vld [vmem:[#allocation4] sm:$0xff]
    %v81 = vld [vmem:[%s2] sm:$0x1]
    %v83 = vlaneseq
    %v84 = vshrl.u32 %v83, 7
    %v85 = vsub.s32 0, %v84
    %v86 = vrot.slane %v81, %v85
    %vm88 = vcmask 64512
    %v90 = vsel %vm88, %v79, 0
    %92 = vmatprep.subr.mxu0 0.0
    %93 = vmatpush1.msra.mxu0 0.0
    %94 = vmatprep.subr.mxu0 0.0
    %95 = vmatpush1.msra.mxu0 0.0
    %96 = vmatprep.subr.mxu0 0.0
    %97 = vmatpush1.msra.mxu0 0.0
    %98 = vmatprep.subr.mxu0 0.0
    %99 = vmatpush1.msra.mxu0 0.0
    %100 = vmatprep.subr.mxu0 0.0
    %101 = vmatpush1.msra.mxu0 0.0
    %102 = vmatprep.subr.mxu0 0.0
    %103 = vmatpush1.msra.mxu0 0.0
    %104 = vmatprep.subr.mxu0 0.0
    %105 = vmatpush1.msra.mxu0 0.0
    %106 = vmatprep.subr.mxu0 0.0
    %107 = vmatpush1.msra.mxu0 0.0
    %108 = vmatprep.subr.mxu0 0.0
    %109 = vmatpush1.msra.mxu0 0.0
    %110 = vmatprep.subr.mxu0 0.0
    %111 = vmatpush1.msra.mxu0 0.0
    %112 = vmatprep.subr.mxu0 0.0
    %113 = vmatpush1.msra.mxu0 0.0
    %114 = vmatprep.subr.mxu0 0.0
    %115 = vmatpush1.msra.mxu0 0.0
    %116 = vmatprep.subr.mxu0 0.0
    %117 = vmatpush1.msra.mxu0 0.0
    %118 = vmatprep.subr.mxu0 0.0
    %119 = vmatpush1.msra.mxu0 0.0
    %120 = vmatprep.subr.mxu0 0.0
    %121 = vmatpush1.msra.mxu0 0.0
    %122 = vmatprep.subr.mxu0 0.0
    %v123 = vand.u32 %v80, 4294901760
    %124 = vmatpush1.msra.mxu0 %v123
    %125 = vmatprep.subr.mxu0 0.0
    %126 = vmatpush2.msra.mxu0 0.0
    %127 = vmatprep.subr.mxu0 0.0
    %128 = vmatpush2.msra.mxu0 0.0
    %129 = vmatprep.subr.mxu0 0.0
    %130 = vmatpush2.msra.mxu0 0.0
    %131 = vmatprep.subr.mxu0 0.0
    %132 = vmatpush2.msra.mxu0 0.0
    %133 = vmatprep.subr.mxu0 0.0
    %134 = vmatpush2.msra.mxu0 0.0
    %135 = vmatprep.subr.mxu0 0.0
    %136 = vmatpush2.msra.mxu0 0.0
    %137 = vmatprep.subr.mxu0 0.0
    %138 = vmatpush2.msra.mxu0 0.0
    %139 = vmatprep.subr.mxu0 0.0
    %140 = vmatpush2.msra.mxu0 0.0
    %141 = vmatprep.subr.mxu0 0.0
    %142 = vmatpush2.msra.mxu0 0.0
    %143 = vmatprep.subr.mxu0 0.0
    %144 = vmatpush2.msra.mxu0 0.0
    %145 = vmatprep.subr.mxu0 0.0
    %146 = vmatpush2.msra.mxu0 0.0
    %147 = vmatprep.subr.mxu0 0.0
    %148 = vmatpush2.msra.mxu0 0.0
    %149 = vmatprep.subr.mxu0 0.0
    %150 = vmatpush2.msra.mxu0 0.0
    %151 = vmatprep.subr.mxu0 0.0
    %152 = vmatpush2.msra.mxu0 0.0
    %153 = vmatprep.subr.mxu0 0.0
    %154 = vmatpush2.msra.mxu0 0.0
    %155 = vmatprep.subr.mxu0 0.0
    %156 = vmatpush2.msra.mxu0 0.0
    %157 = vmatprep.mubr.f32.mxu0 0.0
    %v158 = vand.u32 %v90, 4294901760
    %v159 = vsub.f32 %v90, %v158
    %v160 = vand.u32 %v159, 4294901760
    %v161 = vsub.f32 %v159, %v160
    %v162 = vand.u32 %v161, 4294901760
    %163 = vmatmul.mubr.f32.gmra.mxu0 %v162
    %v164 = vpop.f32.mrf.mxu0
    %v165 = vadd.f32 %v86, %v164
    %v166 = vpop.f32.mrf.mxu0
    %167 = vdwg.mxu0
    %168 = vmatprep.subr.mxu0 0.0
    %169 = vmatpush1.msra.mxu0 0.0
    %170 = vmatprep.subr.mxu0 0.0
    %171 = vmatpush1.msra.mxu0 0.0
    %172 = vmatprep.subr.mxu0 0.0
    %173 = vmatpush1.msra.mxu0 0.0
    %174 = vmatprep.subr.mxu0 0.0
    %175 = vmatpush1.msra.mxu0 0.0
    %176 = vmatprep.subr.mxu0 0.0
    %177 = vmatpush1.msra.mxu0 0.0
    %178 = vmatprep.subr.mxu0 0.0
    %179 = vmatpush1.msra.mxu0 0.0
    %180 = vmatprep.subr.mxu0 0.0
    %181 = vmatpush1.msra.mxu0 0.0
    %182 = vmatprep.subr.mxu0 0.0
    %183 = vmatpush1.msra.mxu0 0.0
    %184 = vmatprep.subr.mxu0 0.0
    %185 = vmatpush1.msra.mxu0 0.0
    %186 = vmatprep.subr.mxu0 0.0
    %187 = vmatpush1.msra.mxu0 0.0
    %188 = vmatprep.subr.mxu0 0.0
    %189 = vmatpush1.msra.mxu0 0.0
    %190 = vmatprep.subr.mxu0 0.0
    %191 = vmatpush1.msra.mxu0 0.0
    %192 = vmatprep.subr.mxu0 0.0
    %193 = vmatpush1.msra.mxu0 0.0
    %194 = vmatprep.subr.mxu0 0.0
    %195 = vmatpush1.msra.mxu0 0.0
    %196 = vmatprep.subr.mxu0 0.0
    %197 = vmatpush1.msra.mxu0 0.0
    %198 = vmatprep.subr.mxu0 0.0
    %v199 = vand.u32 %v80, 4294901760
    %v200 = vsub.f32 %v80, %v199
    %v201 = vand.u32 %v200, 4294901760
    %v202 = vsub.f32 %v200, %v201
    %v203 = vand.u32 %v202, 4294901760
    %204 = vmatpush1.msra.mxu0 %v203
    %205 = vmatprep.subr.mxu0 0.0
    %206 = vmatpush2.msra.mxu0 0.0
    %207 = vmatprep.subr.mxu0 0.0
    %208 = vmatpush2.msra.mxu0 0.0
    %209 = vmatprep.subr.mxu0 0.0
    %210 = vmatpush2.msra.mxu0 0.0
    %211 = vmatprep.subr.mxu0 0.0
    %212 = vmatpush2.msra.mxu0 0.0
    %213 = vmatprep.subr.mxu0 0.0
    %214 = vmatpush2.msra.mxu0 0.0
    %215 = vmatprep.subr.mxu0 0.0
    %216 = vmatpush2.msra.mxu0 0.0
    %217 = vmatprep.subr.mxu0 0.0
    %218 = vmatpush2.msra.mxu0 0.0
    %219 = vmatprep.subr.mxu0 0.0
    %220 = vmatpush2.msra.mxu0 0.0
    %221 = vmatprep.subr.mxu0 0.0
    %222 = vmatpush2.msra.mxu0 0.0
    %223 = vmatprep.subr.mxu0 0.0
    %224 = vmatpush2.msra.mxu0 0.0
    %225 = vmatprep.subr.mxu0 0.0
    %226 = vmatpush2.msra.mxu0 0.0
    %227 = vmatprep.subr.mxu0 0.0
    %228 = vmatpush2.msra.mxu0 0.0
    %229 = vmatprep.subr.mxu0 0.0
    %230 = vmatpush2.msra.mxu0 0.0
    %231 = vmatprep.subr.mxu0 0.0
    %232 = vmatpush2.msra.mxu0 0.0
    %233 = vmatprep.subr.mxu0 0.0
    %234 = vmatpush2.msra.mxu0 0.0
    %235 = vmatprep.subr.mxu0 0.0
    %236 = vmatpush2.msra.mxu0 0.0
    %237 = vmatprep.mubr.f32.mxu0 0.0
    %v238 = vand.u32 %v90, 4294901760
    %239 = vmatmul.mubr.f32.gmra.mxu0 %v238
    %v240 = vpop.f32.mrf.mxu0
    %v241 = vadd.f32 %v165, %v240
    %v242 = vpop.f32.mrf.mxu0
    %243 = vdwg.mxu0
    %244 = vmatprep.subr.mxu0 0.0
    %245 = vmatpush1.msra.mxu0 0.0
    %246 = vmatprep.subr.mxu0 0.0
    %247 = vmatpush1.msra.mxu0 0.0
    %248 = vmatprep.subr.mxu0 0.0
    %249 = vmatpush1.msra.mxu0 0.0
    %250 = vmatprep.subr.mxu0 0.0
    %251 = vmatpush1.msra.mxu0 0.0
    %252 = vmatprep.subr.mxu0 0.0
    %253 = vmatpush1.msra.mxu0 0.0
    %254 = vmatprep.subr.mxu0 0.0
    %255 = vmatpush1.msra.mxu0 0.0
    %256 = vmatprep.subr.mxu0 0.0
    %257 = vmatpush1.msra.mxu0 0.0
    %258 = vmatprep.subr.mxu0 0.0
    %259 = vmatpush1.msra.mxu0 0.0
    %260 = vmatprep.subr.mxu0 0.0
    %261 = vmatpush1.msra.mxu0 0.0
    %262 = vmatprep.subr.mxu0 0.0
    %263 = vmatpush1.msra.mxu0 0.0
    %264 = vmatprep.subr.mxu0 0.0
    %265 = vmatpush1.msra.mxu0 0.0
    %266 = vmatprep.subr.mxu0 0.0
    %267 = vmatpush1.msra.mxu0 0.0
    %268 = vmatprep.subr.mxu0 0.0
    %269 = vmatpush1.msra.mxu0 0.0
    %270 = vmatprep.subr.mxu0 0.0
    %271 = vmatpush1.msra.mxu0 0.0
    %272 = vmatprep.subr.mxu0 0.0
    %273 = vmatpush1.msra.mxu0 0.0
    %274 = vmatprep.subr.mxu0 0.0
    %v275 = vand.u32 %v80, 4294901760
    %v276 = vsub.f32 %v80, %v275
    %277 = vmatpush1.msra.mxu0 %v276
    %278 = vmatprep.subr.mxu0 0.0
    %279 = vmatpush2.msra.mxu0 0.0
    %280 = vmatprep.subr.mxu0 0.0
    %281 = vmatpush2.msra.mxu0 0.0
    %282 = vmatprep.subr.mxu0 0.0
    %283 = vmatpush2.msra.mxu0 0.0
    %284 = vmatprep.subr.mxu0 0.0
    %285 = vmatpush2.msra.mxu0 0.0
    %286 = vmatprep.subr.mxu0 0.0
    %287 = vmatpush2.msra.mxu0 0.0
    %288 = vmatprep.subr.mxu0 0.0
    %289 = vmatpush2.msra.mxu0 0.0
    %290 = vmatprep.subr.mxu0 0.0
    %291 = vmatpush2.msra.mxu0 0.0
    %292 = vmatprep.subr.mxu0 0.0
    %293 = vmatpush2.msra.mxu0 0.0
    %294 = vmatprep.subr.mxu0 0.0
    %295 = vmatpush2.msra.mxu0 0.0
    %296 = vmatprep.subr.mxu0 0.0
    %297 = vmatpush2.msra.mxu0 0.0
    %298 = vmatprep.subr.mxu0 0.0
    %299 = vmatpush2.msra.mxu0 0.0
    %300 = vmatprep.subr.mxu0 0.0
    %301 = vmatpush2.msra.mxu0 0.0
    %302 = vmatprep.subr.mxu0 0.0
    %303 = vmatpush2.msra.mxu0 0.0
    %304 = vmatprep.subr.mxu0 0.0
    %305 = vmatpush2.msra.mxu0 0.0
    %306 = vmatprep.subr.mxu0 0.0
    %307 = vmatpush2.msra.mxu0 0.0
    %308 = vmatprep.subr.mxu0 0.0
    %309 = vmatpush2.msra.mxu0 0.0
    %310 = vmatprep.mubr.f32.mxu0 0.0
    %v311 = vand.u32 %v90, 4294901760
    %v312 = vsub.f32 %v90, %v311
    %313 = vmatmul.mubr.f32.gmra.mxu0 %v312
    %v314 = vpop.f32.mrf.mxu0
    %v315 = vadd.f32 %v241, %v314
    %v316 = vpop.f32.mrf.mxu0
    %317 = vdwg.mxu0
    %318 = vmatprep.subr.mxu0 0.0
    %319 = vmatpush1.msra.mxu0 0.0
    %320 = vmatprep.subr.mxu0 0.0
    %321 = vmatpush1.msra.mxu0 0.0
    %322 = vmatprep.subr.mxu0 0.0
    %323 = vmatpush1.msra.mxu0 0.0
    %324 = vmatprep.subr.mxu0 0.0
    %325 = vmatpush1.msra.mxu0 0.0
    %326 = vmatprep.subr.mxu0 0.0
    %327 = vmatpush1.msra.mxu0 0.0
    %328 = vmatprep.subr.mxu0 0.0
    %329 = vmatpush1.msra.mxu0 0.0
    %330 = vmatprep.subr.mxu0 0.0
    %331 = vmatpush1.msra.mxu0 0.0
    %332 = vmatprep.subr.mxu0 0.0
    %333 = vmatpush1.msra.mxu0 0.0
    %334 = vmatprep.subr.mxu0 0.0
    %335 = vmatpush1.msra.mxu0 0.0
    %336 = vmatprep.subr.mxu0 0.0
    %337 = vmatpush1.msra.mxu0 0.0
    %338 = vmatprep.subr.mxu0 0.0
    %339 = vmatpush1.msra.mxu0 0.0
    %340 = vmatprep.subr.mxu0 0.0
    %341 = vmatpush1.msra.mxu0 0.0
    %342 = vmatprep.subr.mxu0 0.0
    %343 = vmatpush1.msra.mxu0 0.0
    %344 = vmatprep.subr.mxu0 0.0
    %345 = vmatpush1.msra.mxu0 0.0
    %346 = vmatprep.subr.mxu0 0.0
    %347 = vmatpush1.msra.mxu0 0.0
    %348 = vmatprep.subr.mxu0 0.0
    %v349 = vand.u32 %v80, 4294901760
    %350 = vmatpush1.msra.mxu0 %v349
    %351 = vmatprep.subr.mxu0 0.0
    %352 = vmatpush2.msra.mxu0 0.0
    %353 = vmatprep.subr.mxu0 0.0
    %354 = vmatpush2.msra.mxu0 0.0
    %355 = vmatprep.subr.mxu0 0.0
    %356 = vmatpush2.msra.mxu0 0.0
    %357 = vmatprep.subr.mxu0 0.0
    %358 = vmatpush2.msra.mxu0 0.0
    %359 = vmatprep.subr.mxu0 0.0
    %360 = vmatpush2.msra.mxu0 0.0
    %361 = vmatprep.subr.mxu0 0.0
    %362 = vmatpush2.msra.mxu0 0.0
    %363 = vmatprep.subr.mxu0 0.0
    %364 = vmatpush2.msra.mxu0 0.0
    %365 = vmatprep.subr.mxu0 0.0
    %366 = vmatpush2.msra.mxu0 0.0
    %367 = vmatprep.subr.mxu0 0.0
    %368 = vmatpush2.msra.mxu0 0.0
    %369 = vmatprep.subr.mxu0 0.0
    %370 = vmatpush2.msra.mxu0 0.0
    %371 = vmatprep.subr.mxu0 0.0
    %372 = vmatpush2.msra.mxu0 0.0
    %373 = vmatprep.subr.mxu0 0.0
    %374 = vmatpush2.msra.mxu0 0.0
    %375 = vmatprep.subr.mxu0 0.0
    %376 = vmatpush2.msra.mxu0 0.0
    %377 = vmatprep.subr.mxu0 0.0
    %378 = vmatpush2.msra.mxu0 0.0
    %379 = vmatprep.subr.mxu0 0.0
    %380 = vmatpush2.msra.mxu0 0.0
    %381 = vmatprep.subr.mxu0 0.0
    %382 = vmatpush2.msra.mxu0 0.0
    %383 = vmatprep.mubr.f32.mxu0 0.0
    %v384 = vand.u32 %v90, 4294901760
    %v385 = vsub.f32 %v90, %v384
    %v386 = vand.u32 %v385, 4294901760
    %387 = vmatmul.mubr.f32.gmra.mxu0 %v386
    %v388 = vpop.f32.mrf.mxu0
    %v389 = vadd.f32 %v315, %v388
    %v390 = vpop.f32.mrf.mxu0
    %391 = vdwg.mxu0
    %392 = vmatprep.subr.mxu0 0.0
    %393 = vmatpush1.msra.mxu0 0.0
    %394 = vmatprep.subr.mxu0 0.0
    %395 = vmatpush1.msra.mxu0 0.0
    %396 = vmatprep.subr.mxu0 0.0
    %397 = vmatpush1.msra.mxu0 0.0
    %398 = vmatprep.subr.mxu0 0.0
    %399 = vmatpush1.msra.mxu0 0.0
    %400 = vmatprep.subr.mxu0 0.0
    %401 = vmatpush1.msra.mxu0 0.0
    %402 = vmatprep.subr.mxu0 0.0
    %403 = vmatpush1.msra.mxu0 0.0
    %404 = vmatprep.subr.mxu0 0.0
    %405 = vmatpush1.msra.mxu0 0.0
    %406 = vmatprep.subr.mxu0 0.0
    %407 = vmatpush1.msra.mxu0 0.0
    %408 = vmatprep.subr.mxu0 0.0
    %409 = vmatpush1.msra.mxu0 0.0
    %410 = vmatprep.subr.mxu0 0.0
    %411 = vmatpush1.msra.mxu0 0.0
    %412 = vmatprep.subr.mxu0 0.0
    %413 = vmatpush1.msra.mxu0 0.0
    %414 = vmatprep.subr.mxu0 0.0
    %415 = vmatpush1.msra.mxu0 0.0
    %416 = vmatprep.subr.mxu0 0.0
    %417 = vmatpush1.msra.mxu0 0.0
    %418 = vmatprep.subr.mxu0 0.0
    %419 = vmatpush1.msra.mxu0 0.0
    %420 = vmatprep.subr.mxu0 0.0
    %421 = vmatpush1.msra.mxu0 0.0
    %422 = vmatprep.subr.mxu0 0.0
    %v423 = vand.u32 %v80, 4294901760
    %v424 = vsub.f32 %v80, %v423
    %v425 = vand.u32 %v424, 4294901760
    %426 = vmatpush1.msra.mxu0 %v425
    %427 = vmatprep.subr.mxu0 0.0
    %428 = vmatpush2.msra.mxu0 0.0
    %429 = vmatprep.subr.mxu0 0.0
    %430 = vmatpush2.msra.mxu0 0.0
    %431 = vmatprep.subr.mxu0 0.0
    %432 = vmatpush2.msra.mxu0 0.0
    %433 = vmatprep.subr.mxu0 0.0
    %434 = vmatpush2.msra.mxu0 0.0
    %435 = vmatprep.subr.mxu0 0.0
    %436 = vmatpush2.msra.mxu0 0.0
    %437 = vmatprep.subr.mxu0 0.0
    %438 = vmatpush2.msra.mxu0 0.0
    %439 = vmatprep.subr.mxu0 0.0
    %440 = vmatpush2.msra.mxu0 0.0
    %441 = vmatprep.subr.mxu0 0.0
    %442 = vmatpush2.msra.mxu0 0.0
    %443 = vmatprep.subr.mxu0 0.0
    %444 = vmatpush2.msra.mxu0 0.0
    %445 = vmatprep.subr.mxu0 0.0
    %446 = vmatpush2.msra.mxu0 0.0
    %447 = vmatprep.subr.mxu0 0.0
    %448 = vmatpush2.msra.mxu0 0.0
    %449 = vmatprep.subr.mxu0 0.0
    %450 = vmatpush2.msra.mxu0 0.0
    %451 = vmatprep.subr.mxu0 0.0
    %452 = vmatpush2.msra.mxu0 0.0
    %453 = vmatprep.subr.mxu0 0.0
    %454 = vmatpush2.msra.mxu0 0.0
    %455 = vmatprep.subr.mxu0 0.0
    %456 = vmatpush2.msra.mxu0 0.0
    %457 = vmatprep.subr.mxu0 0.0
    %458 = vmatpush2.msra.mxu0 0.0
    %459 = vmatprep.mubr.f32.mxu0 0.0
    %v460 = vand.u32 %v90, 4294901760
    %461 = vmatmul.mubr.f32.gmra.mxu0 %v460
    %v462 = vpop.f32.mrf.mxu0
    %v463 = vadd.f32 %v389, %v462
    %v464 = vpop.f32.mrf.mxu0
    %465 = vdwg.mxu0
    %466 = vmatprep.subr.mxu0 0.0
    %467 = vmatpush1.msra.mxu0 0.0
    %468 = vmatprep.subr.mxu0 0.0
    %469 = vmatpush1.msra.mxu0 0.0
    %470 = vmatprep.subr.mxu0 0.0
    %471 = vmatpush1.msra.mxu0 0.0
    %472 = vmatprep.subr.mxu0 0.0
    %473 = vmatpush1.msra.mxu0 0.0
    %474 = vmatprep.subr.mxu0 0.0
    %475 = vmatpush1.msra.mxu0 0.0
    %476 = vmatprep.subr.mxu0 0.0
    %477 = vmatpush1.msra.mxu0 0.0
    %478 = vmatprep.subr.mxu0 0.0
    %479 = vmatpush1.msra.mxu0 0.0
    %480 = vmatprep.subr.mxu0 0.0
    %481 = vmatpush1.msra.mxu0 0.0
    %482 = vmatprep.subr.mxu0 0.0
    %483 = vmatpush1.msra.mxu0 0.0
    %484 = vmatprep.subr.mxu0 0.0
    %485 = vmatpush1.msra.mxu0 0.0
    %486 = vmatprep.subr.mxu0 0.0
    %487 = vmatpush1.msra.mxu0 0.0
    %488 = vmatprep.subr.mxu0 0.0
    %489 = vmatpush1.msra.mxu0 0.0
    %490 = vmatprep.subr.mxu0 0.0
    %491 = vmatpush1.msra.mxu0 0.0
    %492 = vmatprep.subr.mxu0 0.0
    %493 = vmatpush1.msra.mxu0 0.0
    %494 = vmatprep.subr.mxu0 0.0
    %495 = vmatpush1.msra.mxu0 0.0
    %496 = vmatprep.subr.mxu0 0.0
    %v497 = vand.u32 %v80, 4294901760
    %498 = vmatpush1.msra.mxu0 %v497
    %499 = vmatprep.subr.mxu0 0.0
    %500 = vmatpush2.msra.mxu0 0.0
    %501 = vmatprep.subr.mxu0 0.0
    %502 = vmatpush2.msra.mxu0 0.0
    %503 = vmatprep.subr.mxu0 0.0
    %504 = vmatpush2.msra.mxu0 0.0
    %505 = vmatprep.subr.mxu0 0.0
    %506 = vmatpush2.msra.mxu0 0.0
    %507 = vmatprep.subr.mxu0 0.0
    %508 = vmatpush2.msra.mxu0 0.0
    %509 = vmatprep.subr.mxu0 0.0
    %510 = vmatpush2.msra.mxu0 0.0
    %511 = vmatprep.subr.mxu0 0.0
    %512 = vmatpush2.msra.mxu0 0.0
    %513 = vmatprep.subr.mxu0 0.0
    %514 = vmatpush2.msra.mxu0 0.0
    %515 = vmatprep.subr.mxu0 0.0
    %516 = vmatpush2.msra.mxu0 0.0
    %517 = vmatprep.subr.mxu0 0.0
    %518 = vmatpush2.msra.mxu0 0.0
    %519 = vmatprep.subr.mxu0 0.0
    %520 = vmatpush2.msra.mxu0 0.0
    %521 = vmatprep.subr.mxu0 0.0
    %522 = vmatpush2.msra.mxu0 0.0
    %523 = vmatprep.subr.mxu0 0.0
    %524 = vmatpush2.msra.mxu0 0.0
    %525 = vmatprep.subr.mxu0 0.0
    %526 = vmatpush2.msra.mxu0 0.0
    %527 = vmatprep.subr.mxu0 0.0
    %528 = vmatpush2.msra.mxu0 0.0
    %529 = vmatprep.subr.mxu0 0.0
    %530 = vmatpush2.msra.mxu0 0.0
    %531 = vmatprep.mubr.f32.mxu0 0.0
    %v532 = vand.u32 %v90, 4294901760
    %533 = vmatmul.mubr.f32.gmra.mxu0 %v532
    %v534 = vpop.f32.mrf.mxu0
    %v535 = vadd.f32 %v463, %v534
    %v536 = vpop.f32.mrf.mxu0
    %537 = vdwg.mxu0
    %v538 = vtanh.pop %v535
    %v539 = vld [vmem:[#allocation6] sm:$0xff]
    %v540 = vld [vmem:[#allocation6 + $0x8] sm:$0xff]
    %v541 = vld [vmem:[#allocation6 + $0x10] sm:$0xff]
    %v542 = vld [vmem:[#allocation6 + $0x18] sm:$0xff]
    %v543 = vld [vmem:[#allocation6 + $0x20] sm:$0xff]
    %v544 = vld [vmem:[#allocation6 + $0x28] sm:$0xff]
    %v545 = vld [vmem:[#allocation6 + $0x30] sm:$0xff]
    %v546 = vld [vmem:[#allocation6 + $0x38] sm:$0xff]
    %v547 = vld [vmem:[#allocation6 + $0x40] sm:$0xff]
    %v548 = vld [vmem:[#allocation6 + $0x48] sm:$0xff]
    %v549 = vld [vmem:[#allocation6 + $0x50] sm:$0xff]
    %v550 = vld [vmem:[#allocation6 + $0x58] sm:$0xff]
    %v551 = vld [vmem:[#allocation6 + $0x60] sm:$0xff]
    %v552 = vld [vmem:[#allocation6 + $0x68] sm:$0xff]
    %v553 = vld [vmem:[#allocation6 + $0x70] sm:$0xff]
    %v554 = vld [vmem:[#allocation6 + $0x78] sm:$0xff]
    %v555 = vld [vmem:[%s4] sm:$0x1]
    %v557 = vlaneseq
    %v558 = vshrl.u32 %v557, 7
    %v559 = vsub.s32 0, %v558
    %v560 = vrot.slane %v555, %v559
    %562 = vmatprep.subr.mxu0 0.0
    %v563 = vand.u32 %v554, 4294901760
    %564 = vmatpush1.msra.mxu0 %v563
    %565 = vmatprep.subr.mxu0 0.0
    %v566 = vand.u32 %v553, 4294901760
    %567 = vmatpush1.msra.mxu0 %v566
    %568 = vmatprep.subr.mxu0 0.0
    %v569 = vand.u32 %v552, 4294901760
    %570 = vmatpush1.msra.mxu0 %v569
    %571 = vmatprep.subr.mxu0 0.0
    %v572 = vand.u32 %v551, 4294901760
    %573 = vmatpush1.msra.mxu0 %v572
    %574 = vmatprep.subr.mxu0 0.0
    %v575 = vand.u32 %v550, 4294901760
    %576 = vmatpush1.msra.mxu0 %v575
    %577 = vmatprep.subr.mxu0 0.0
    %v578 = vand.u32 %v549, 4294901760
    %579 = vmatpush1.msra.mxu0 %v578
    %580 = vmatprep.subr.mxu0 0.0
    %v581 = vand.u32 %v548, 4294901760
    %582 = vmatpush1.msra.mxu0 %v581
    %583 = vmatprep.subr.mxu0 0.0
    %v584 = vand.u32 %v547, 4294901760
    %585 = vmatpush1.msra.mxu0 %v584
    %586 = vmatprep.subr.mxu0 0.0
    %v587 = vand.u32 %v546, 4294901760
    %588 = vmatpush1.msra.mxu0 %v587
    %589 = vmatprep.subr.mxu0 0.0
    %v590 = vand.u32 %v545, 4294901760
    %591 = vmatpush1.msra.mxu0 %v590
    %592 = vmatprep.subr.mxu0 0.0
    %v593 = vand.u32 %v544, 4294901760
    %594 = vmatpush1.msra.mxu0 %v593
    %595 = vmatprep.subr.mxu0 0.0
    %v596 = vand.u32 %v543, 4294901760
    %597 = vmatpush1.msra.mxu0 %v596
    %598 = vmatprep.subr.mxu0 0.0
    %v599 = vand.u32 %v542, 4294901760
    %600 = vmatpush1.msra.mxu0 %v599
    %601 = vmatprep.subr.mxu0 0.0
    %v602 = vand.u32 %v541, 4294901760
    %603 = vmatpush1.msra.mxu0 %v602
    %604 = vmatprep.subr.mxu0 0.0
    %v605 = vand.u32 %v540, 4294901760
    %606 = vmatpush1.msra.mxu0 %v605
    %607 = vmatprep.subr.mxu0 0.0
    %v608 = vand.u32 %v539, 4294901760
    %609 = vmatpush1.msra.mxu0 %v608
    %610 = vmatprep.subr.mxu0 0.0
    %611 = vmatpush2.msra.mxu0 0.0
    %612 = vmatprep.subr.mxu0 0.0
    %613 = vmatpush2.msra.mxu0 0.0
    %614 = vmatprep.subr.mxu0 0.0
    %615 = vmatpush2.msra.mxu0 0.0
    %616 = vmatprep.subr.mxu0 0.0
    %617 = vmatpush2.msra.mxu0 0.0
    %618 = vmatprep.subr.mxu0 0.0
    %619 = vmatpush2.msra.mxu0 0.0
    %620 = vmatprep.subr.mxu0 0.0
    %621 = vmatpush2.msra.mxu0 0.0
    %622 = vmatprep.subr.mxu0 0.0
    %623 = vmatpush2.msra.mxu0 0.0
    %624 = vmatprep.subr.mxu0 0.0
    %625 = vmatpush2.msra.mxu0 0.0
    %626 = vmatprep.subr.mxu0 0.0
    %627 = vmatpush2.msra.mxu0 0.0
    %628 = vmatprep.subr.mxu0 0.0
    %629 = vmatpush2.msra.mxu0 0.0
    %630 = vmatprep.subr.mxu0 0.0
    %631 = vmatpush2.msra.mxu0 0.0
    %632 = vmatprep.subr.mxu0 0.0
    %633 = vmatpush2.msra.mxu0 0.0
    %634 = vmatprep.subr.mxu0 0.0
    %635 = vmatpush2.msra.mxu0 0.0
    %636 = vmatprep.subr.mxu0 0.0
    %637 = vmatpush2.msra.mxu0 0.0
    %638 = vmatprep.subr.mxu0 0.0
    %639 = vmatpush2.msra.mxu0 0.0
    %640 = vmatprep.subr.mxu0 0.0
    %641 = vmatpush2.msra.mxu0 0.0
    %642 = vmatprep.mubr.f32.mxu0 0.0
    %v643 = vand.u32 %v538, 4294901760
    %v644 = vsub.f32 %v538, %v643
    %v645 = vand.u32 %v644, 4294901760
    %v646 = vsub.f32 %v644, %v645
    %v647 = vand.u32 %v646, 4294901760
    %648 = vmatmul.mubr.f32.gmra.mxu0 %v647
    %v649 = vpop.f32.mrf.mxu0
    %v650 = vadd.f32 %v560, %v649
    %v651 = vpop.f32.mrf.mxu0
    %652 = vdwg.mxu0
    %653 = vmatprep.subr.mxu0 0.0
    %v654 = vand.u32 %v554, 4294901760
    %v655 = vsub.f32 %v554, %v654
    %v656 = vand.u32 %v655, 4294901760
    %v657 = vsub.f32 %v655, %v656
    %v658 = vand.u32 %v657, 4294901760
    %659 = vmatpush1.msra.mxu0 %v658
    %660 = vmatprep.subr.mxu0 0.0
    %v661 = vand.u32 %v553, 4294901760
    %v662 = vsub.f32 %v553, %v661
    %v663 = vand.u32 %v662, 4294901760
    %v664 = vsub.f32 %v662, %v663
    %v665 = vand.u32 %v664, 4294901760
    %666 = vmatpush1.msra.mxu0 %v665
    %667 = vmatprep.subr.mxu0 0.0
    %v668 = vand.u32 %v552, 4294901760
    %v669 = vsub.f32 %v552, %v668
    %v670 = vand.u32 %v669, 4294901760
    %v671 = vsub.f32 %v669, %v670
    %v672 = vand.u32 %v671, 4294901760
    %673 = vmatpush1.msra.mxu0 %v672
    %674 = vmatprep.subr.mxu0 0.0
    %v675 = vand.u32 %v551, 4294901760
    %v676 = vsub.f32 %v551, %v675
    %v677 = vand.u32 %v676, 4294901760
    %v678 = vsub.f32 %v676, %v677
    %v679 = vand.u32 %v678, 4294901760
    %680 = vmatpush1.msra.mxu0 %v679
    %681 = vmatprep.subr.mxu0 0.0
    %v682 = vand.u32 %v550, 4294901760
    %v683 = vsub.f32 %v550, %v682
    %v684 = vand.u32 %v683, 4294901760
    %v685 = vsub.f32 %v683, %v684
    %v686 = vand.u32 %v685, 4294901760
    %687 = vmatpush1.msra.mxu0 %v686
    %688 = vmatprep.subr.mxu0 0.0
    %v689 = vand.u32 %v549, 4294901760
    %v690 = vsub.f32 %v549, %v689
    %v691 = vand.u32 %v690, 4294901760
    %v692 = vsub.f32 %v690, %v691
    %v693 = vand.u32 %v692, 4294901760
    %694 = vmatpush1.msra.mxu0 %v693
    %695 = vmatprep.subr.mxu0 0.0
    %v696 = vand.u32 %v548, 4294901760
    %v697 = vsub.f32 %v548, %v696
    %v698 = vand.u32 %v697, 4294901760
    %v699 = vsub.f32 %v697, %v698
    %v700 = vand.u32 %v699, 4294901760
    %701 = vmatpush1.msra.mxu0 %v700
    %702 = vmatprep.subr.mxu0 0.0
    %v703 = vand.u32 %v547, 4294901760
    %v704 = vsub.f32 %v547, %v703
    %v705 = vand.u32 %v704, 4294901760
    %v706 = vsub.f32 %v704, %v705
    %v707 = vand.u32 %v706, 4294901760
    %708 = vmatpush1.msra.mxu0 %v707
    %709 = vmatprep.subr.mxu0 0.0
    %v710 = vand.u32 %v546, 4294901760
    %v711 = vsub.f32 %v546, %v710
    %v712 = vand.u32 %v711, 4294901760
    %v713 = vsub.f32 %v711, %v712
    %v714 = vand.u32 %v713, 4294901760
    %715 = vmatpush1.msra.mxu0 %v714
    %716 = vmatprep.subr.mxu0 0.0
    %v717 = vand.u32 %v545, 4294901760
    %v718 = vsub.f32 %v545, %v717
    %v719 = vand.u32 %v718, 4294901760
    %v720 = vsub.f32 %v718, %v719
    %v721 = vand.u32 %v720, 4294901760
    %722 = vmatpush1.msra.mxu0 %v721
    %723 = vmatprep.subr.mxu0 0.0
    %v724 = vand.u32 %v544, 4294901760
    %v725 = vsub.f32 %v544, %v724
    %v726 = vand.u32 %v725, 4294901760
    %v727 = vsub.f32 %v725, %v726
    %v728 = vand.u32 %v727, 4294901760
    %729 = vmatpush1.msra.mxu0 %v728
    %730 = vmatprep.subr.mxu0 0.0
    %v731 = vand.u32 %v543, 4294901760
    %v732 = vsub.f32 %v543, %v731
    %v733 = vand.u32 %v732, 4294901760
    %v734 = vsub.f32 %v732, %v733
    %v735 = vand.u32 %v734, 4294901760
    %736 = vmatpush1.msra.mxu0 %v735
    %737 = vmatprep.subr.mxu0 0.0
    %v738 = vand.u32 %v542, 4294901760
    %v739 = vsub.f32 %v542, %v738
    %v740 = vand.u32 %v739, 4294901760
    %v741 = vsub.f32 %v739, %v740
    %v742 = vand.u32 %v741, 4294901760
    %743 = vmatpush1.msra.mxu0 %v742
    %744 = vmatprep.subr.mxu0 0.0
    %v745 = vand.u32 %v541, 4294901760
    %v746 = vsub.f32 %v541, %v745
    %v747 = vand.u32 %v746, 4294901760
    %v748 = vsub.f32 %v746, %v747
    %v749 = vand.u32 %v748, 4294901760
    %750 = vmatpush1.msra.mxu0 %v749
    %751 = vmatprep.subr.mxu0 0.0
    %v752 = vand.u32 %v540, 4294901760
    %v753 = vsub.f32 %v540, %v752
    %v754 = vand.u32 %v753, 4294901760
    %v755 = vsub.f32 %v753, %v754
    %v756 = vand.u32 %v755, 4294901760
    %757 = vmatpush1.msra.mxu0 %v756
    %758 = vmatprep.subr.mxu0 0.0
    %v759 = vand.u32 %v539, 4294901760
    %v760 = vsub.f32 %v539, %v759
    %v761 = vand.u32 %v760, 4294901760
    %v762 = vsub.f32 %v760, %v761
    %v763 = vand.u32 %v762, 4294901760
    %764 = vmatpush1.msra.mxu0 %v763
    %765 = vmatprep.subr.mxu0 0.0
    %766 = vmatpush2.msra.mxu0 0.0
    %767 = vmatprep.subr.mxu0 0.0
    %768 = vmatpush2.msra.mxu0 0.0
    %769 = vmatprep.subr.mxu0 0.0
    %770 = vmatpush2.msra.mxu0 0.0
    %771 = vmatprep.subr.mxu0 0.0
    %772 = vmatpush2.msra.mxu0 0.0
    %773 = vmatprep.subr.mxu0 0.0
    %774 = vmatpush2.msra.mxu0 0.0
    %775 = vmatprep.subr.mxu0 0.0
    %776 = vmatpush2.msra.mxu0 0.0
    %777 = vmatprep.subr.mxu0 0.0
    %778 = vmatpush2.msra.mxu0 0.0
    %779 = vmatprep.subr.mxu0 0.0
    %780 = vmatpush2.msra.mxu0 0.0
    %781 = vmatprep.subr.mxu0 0.0
    %782 = vmatpush2.msra.mxu0 0.0
    %783 = vmatprep.subr.mxu0 0.0
    %784 = vmatpush2.msra.mxu0 0.0
    %785 = vmatprep.subr.mxu0 0.0
    %786 = vmatpush2.msra.mxu0 0.0
    %787 = vmatprep.subr.mxu0 0.0
    %788 = vmatpush2.msra.mxu0 0.0
    %789 = vmatprep.subr.mxu0 0.0
    %790 = vmatpush2.msra.mxu0 0.0
    %791 = vmatprep.subr.mxu0 0.0
    %792 = vmatpush2.msra.mxu0 0.0
    %793 = vmatprep.subr.mxu0 0.0
    %794 = vmatpush2.msra.mxu0 0.0
    %795 = vmatprep.subr.mxu0 0.0
    %796 = vmatpush2.msra.mxu0 0.0
    %797 = vmatprep.mubr.f32.mxu0 0.0
    %v798 = vand.u32 %v538, 4294901760
    %799 = vmatmul.mubr.f32.gmra.mxu0 %v798
    %v800 = vpop.f32.mrf.mxu0
    %v801 = vadd.f32 %v650, %v800
    %v802 = vpop.f32.mrf.mxu0
    %803 = vdwg.mxu0
    %804 = vmatprep.subr.mxu0 0.0
    %v805 = vand.u32 %v554, 4294901760
    %v806 = vsub.f32 %v554, %v805
    %807 = vmatpush1.msra.mxu0 %v806
    %808 = vmatprep.subr.mxu0 0.0
    %v809 = vand.u32 %v553, 4294901760
    %v810 = vsub.f32 %v553, %v809
    %811 = vmatpush1.msra.mxu0 %v810
    %812 = vmatprep.subr.mxu0 0.0
    %v813 = vand.u32 %v552, 4294901760
    %v814 = vsub.f32 %v552, %v813
    %815 = vmatpush1.msra.mxu0 %v814
    %816 = vmatprep.subr.mxu0 0.0
    %v817 = vand.u32 %v551, 4294901760
    %v818 = vsub.f32 %v551, %v817
    %819 = vmatpush1.msra.mxu0 %v818
    %820 = vmatprep.subr.mxu0 0.0
    %v821 = vand.u32 %v550, 4294901760
    %v822 = vsub.f32 %v550, %v821
    %823 = vmatpush1.msra.mxu0 %v822
    %824 = vmatprep.subr.mxu0 0.0
    %v825 = vand.u32 %v549, 4294901760
    %v826 = vsub.f32 %v549, %v825
    %827 = vmatpush1.msra.mxu0 %v826
    %828 = vmatprep.subr.mxu0 0.0
    %v829 = vand.u32 %v548, 4294901760
    %v830 = vsub.f32 %v548, %v829
    %831 = vmatpush1.msra.mxu0 %v830
    %832 = vmatprep.subr.mxu0 0.0
    %v833 = vand.u32 %v547, 4294901760
    %v834 = vsub.f32 %v547, %v833
    %835 = vmatpush1.msra.mxu0 %v834
    %836 = vmatprep.subr.mxu0 0.0
    %v837 = vand.u32 %v546, 4294901760
    %v838 = vsub.f32 %v546, %v837
    %839 = vmatpush1.msra.mxu0 %v838
    %840 = vmatprep.subr.mxu0 0.0
    %v841 = vand.u32 %v545, 4294901760
    %v842 = vsub.f32 %v545, %v841
    %843 = vmatpush1.msra.mxu0 %v842
    %844 = vmatprep.subr.mxu0 0.0
    %v845 = vand.u32 %v544, 4294901760
    %v846 = vsub.f32 %v544, %v845
    %847 = vmatpush1.msra.mxu0 %v846
    %848 = vmatprep.subr.mxu0 0.0
    %v849 = vand.u32 %v543, 4294901760
    %v850 = vsub.f32 %v543, %v849
    %851 = vmatpush1.msra.mxu0 %v850
    %852 = vmatprep.subr.mxu0 0.0
    %v853 = vand.u32 %v542, 4294901760
    %v854 = vsub.f32 %v542, %v853
    %855 = vmatpush1.msra.mxu0 %v854
    %856 = vmatprep.subr.mxu0 0.0
    %v857 = vand.u32 %v541, 4294901760
    %v858 = vsub.f32 %v541, %v857
    %859 = vmatpush1.msra.mxu0 %v858
    %860 = vmatprep.subr.mxu0 0.0
    %v861 = vand.u32 %v540, 4294901760
    %v862 = vsub.f32 %v540, %v861
    %863 = vmatpush1.msra.mxu0 %v862
    %864 = vmatprep.subr.mxu0 0.0
    %v865 = vand.u32 %v539, 4294901760
    %v866 = vsub.f32 %v539, %v865
    %867 = vmatpush1.msra.mxu0 %v866
    %868 = vmatprep.subr.mxu0 0.0
    %869 = vmatpush2.msra.mxu0 0.0
    %870 = vmatprep.subr.mxu0 0.0
    %871 = vmatpush2.msra.mxu0 0.0
    %872 = vmatprep.subr.mxu0 0.0
    %873 = vmatpush2.msra.mxu0 0.0
    %874 = vmatprep.subr.mxu0 0.0
    %875 = vmatpush2.msra.mxu0 0.0
    %876 = vmatprep.subr.mxu0 0.0
    %877 = vmatpush2.msra.mxu0 0.0
    %878 = vmatprep.subr.mxu0 0.0
    %879 = vmatpush2.msra.mxu0 0.0
    %880 = vmatprep.subr.mxu0 0.0
    %881 = vmatpush2.msra.mxu0 0.0
    %882 = vmatprep.subr.mxu0 0.0
    %883 = vmatpush2.msra.mxu0 0.0
    %884 = vmatprep.subr.mxu0 0.0
    %885 = vmatpush2.msra.mxu0 0.0
    %886 = vmatprep.subr.mxu0 0.0
    %887 = vmatpush2.msra.mxu0 0.0
    %888 = vmatprep.subr.mxu0 0.0
    %889 = vmatpush2.msra.mxu0 0.0
    %890 = vmatprep.subr.mxu0 0.0
    %891 = vmatpush2.msra.mxu0 0.0
    %892 = vmatprep.subr.mxu0 0.0
    %893 = vmatpush2.msra.mxu0 0.0
    %894 = vmatprep.subr.mxu0 0.0
    %895 = vmatpush2.msra.mxu0 0.0
    %896 = vmatprep.subr.mxu0 0.0
    %897 = vmatpush2.msra.mxu0 0.0
    %898 = vmatprep.subr.mxu0 0.0
    %899 = vmatpush2.msra.mxu0 0.0
    %900 = vmatprep.mubr.f32.mxu0 0.0
    %v901 = vand.u32 %v538, 4294901760
    %v902 = vsub.f32 %v538, %v901
    %903 = vmatmul.mubr.f32.gmra.mxu0 %v902
    %v904 = vpop.f32.mrf.mxu0
    %v905 = vadd.f32 %v801, %v904
    %v906 = vpop.f32.mrf.mxu0
    %907 = vdwg.mxu0
    %908 = vmatprep.subr.mxu0 0.0
    %v909 = vand.u32 %v554, 4294901760
    %910 = vmatpush1.msra.mxu0 %v909
    %911 = vmatprep.subr.mxu0 0.0
    %v912 = vand.u32 %v553, 4294901760
    %913 = vmatpush1.msra.mxu0 %v912
    %914 = vmatprep.subr.mxu0 0.0
    %v915 = vand.u32 %v552, 4294901760
    %916 = vmatpush1.msra.mxu0 %v915
    %917 = vmatprep.subr.mxu0 0.0
    %v918 = vand.u32 %v551, 4294901760
    %919 = vmatpush1.msra.mxu0 %v918
    %920 = vmatprep.subr.mxu0 0.0
    %v921 = vand.u32 %v550, 4294901760
    %922 = vmatpush1.msra.mxu0 %v921
    %923 = vmatprep.subr.mxu0 0.0
    %v924 = vand.u32 %v549, 4294901760
    %925 = vmatpush1.msra.mxu0 %v924
    %926 = vmatprep.subr.mxu0 0.0
    %v927 = vand.u32 %v548, 4294901760
    %928 = vmatpush1.msra.mxu0 %v927
    %929 = vmatprep.subr.mxu0 0.0
    %v930 = vand.u32 %v547, 4294901760
    %931 = vmatpush1.msra.mxu0 %v930
    %932 = vmatprep.subr.mxu0 0.0
    %v933 = vand.u32 %v546, 4294901760
    %934 = vmatpush1.msra.mxu0 %v933
    %935 = vmatprep.subr.mxu0 0.0
    %v936 = vand.u32 %v545, 4294901760
    %937 = vmatpush1.msra.mxu0 %v936
    %938 = vmatprep.subr.mxu0 0.0
    %v939 = vand.u32 %v544, 4294901760
    %940 = vmatpush1.msra.mxu0 %v939
    %941 = vmatprep.subr.mxu0 0.0
    %v942 = vand.u32 %v543, 4294901760
    %943 = vmatpush1.msra.mxu0 %v942
    %944 = vmatprep.subr.mxu0 0.0
    %v945 = vand.u32 %v542, 4294901760
    %946 = vmatpush1.msra.mxu0 %v945
    %947 = vmatprep.subr.mxu0 0.0
    %v948 = vand.u32 %v541, 4294901760
    %949 = vmatpush1.msra.mxu0 %v948
    %950 = vmatprep.subr.mxu0 0.0
    %v951 = vand.u32 %v540, 4294901760
    %952 = vmatpush1.msra.mxu0 %v951
    %953 = vmatprep.subr.mxu0 0.0
    %v954 = vand.u32 %v539, 4294901760
    %955 = vmatpush1.msra.mxu0 %v954
    %956 = vmatprep.subr.mxu0 0.0
    %957 = vmatpush2.msra.mxu0 0.0
    %958 = vmatprep.subr.mxu0 0.0
    %959 = vmatpush2.msra.mxu0 0.0
    %960 = vmatprep.subr.mxu0 0.0
    %961 = vmatpush2.msra.mxu0 0.0
    %962 = vmatprep.subr.mxu0 0.0
    %963 = vmatpush2.msra.mxu0 0.0
    %964 = vmatprep.subr.mxu0 0.0
    %965 = vmatpush2.msra.mxu0 0.0
    %966 = vmatprep.subr.mxu0 0.0
    %967 = vmatpush2.msra.mxu0 0.0
    %968 = vmatprep.subr.mxu0 0.0
    %969 = vmatpush2.msra.mxu0 0.0
    %970 = vmatprep.subr.mxu0 0.0
    %971 = vmatpush2.msra.mxu0 0.0
    %972 = vmatprep.subr.mxu0 0.0
    %973 = vmatpush2.msra.mxu0 0.0
    %974 = vmatprep.subr.mxu0 0.0
    %975 = vmatpush2.msra.mxu0 0.0
    %976 = vmatprep.subr.mxu0 0.0
    %977 = vmatpush2.msra.mxu0 0.0
    %978 = vmatprep.subr.mxu0 0.0
    %979 = vmatpush2.msra.mxu0 0.0
    %980 = vmatprep.subr.mxu0 0.0
    %981 = vmatpush2.msra.mxu0 0.0
    %982 = vmatprep.subr.mxu0 0.0
    %983 = vmatpush2.msra.mxu0 0.0
    %984 = vmatprep.subr.mxu0 0.0
    %985 = vmatpush2.msra.mxu0 0.0
    %986 = vmatprep.subr.mxu0 0.0
    %987 = vmatpush2.msra.mxu0 0.0
    %988 = vmatprep.mubr.f32.mxu0 0.0
    %v989 = vand.u32 %v538, 4294901760
    %v990 = vsub.f32 %v538, %v989
    %v991 = vand.u32 %v990, 4294901760
    %992 = vmatmul.mubr.f32.gmra.mxu0 %v991
    %v993 = vpop.f32.mrf.mxu0
    %v994 = vadd.f32 %v905, %v993
    %v995 = vpop.f32.mrf.mxu0
    %996 = vdwg.mxu0
    %997 = vmatprep.subr.mxu0 0.0
    %v998 = vand.u32 %v554, 4294901760
    %v999 = vsub.f32 %v554, %v998
    %v1000 = vand.u32 %v999, 4294901760
    %1001 = vmatpush1.msra.mxu0 %v1000
    %1002 = vmatprep.subr.mxu0 0.0
    %v1003 = vand.u32 %v553, 4294901760
    %v1004 = vsub.f32 %v553, %v1003
    %v1005 = vand.u32 %v1004, 4294901760
    %1006 = vmatpush1.msra.mxu0 %v1005
    %1007 = vmatprep.subr.mxu0 0.0
    %v1008 = vand.u32 %v552, 4294901760
    %v1009 = vsub.f32 %v552, %v1008
    %v1010 = vand.u32 %v1009, 4294901760
    %1011 = vmatpush1.msra.mxu0 %v1010
    %1012 = vmatprep.subr.mxu0 0.0
    %v1013 = vand.u32 %v551, 4294901760
    %v1014 = vsub.f32 %v551, %v1013
    %v1015 = vand.u32 %v1014, 4294901760
    %1016 = vmatpush1.msra.mxu0 %v1015
    %1017 = vmatprep.subr.mxu0 0.0
    %v1018 = vand.u32 %v550, 4294901760
    %v1019 = vsub.f32 %v550, %v1018
    %v1020 = vand.u32 %v1019, 4294901760
    %1021 = vmatpush1.msra.mxu0 %v1020
    %1022 = vmatprep.subr.mxu0 0.0
    %v1023 = vand.u32 %v549, 4294901760
    %v1024 = vsub.f32 %v549, %v1023
    %v1025 = vand.u32 %v1024, 4294901760
    %1026 = vmatpush1.msra.mxu0 %v1025
    %1027 = vmatprep.subr.mxu0 0.0
    %v1028 = vand.u32 %v548, 4294901760
    %v1029 = vsub.f32 %v548, %v1028
    %v1030 = vand.u32 %v1029, 4294901760
    %1031 = vmatpush1.msra.mxu0 %v1030
    %1032 = vmatprep.subr.mxu0 0.0
    %v1033 = vand.u32 %v547, 4294901760
    %v1034 = vsub.f32 %v547, %v1033
    %v1035 = vand.u32 %v1034, 4294901760
    %1036 = vmatpush1.msra.mxu0 %v1035
    %1037 = vmatprep.subr.mxu0 0.0
    %v1038 = vand.u32 %v546, 4294901760
    %v1039 = vsub.f32 %v546, %v1038
    %v1040 = vand.u32 %v1039, 4294901760
    %1041 = vmatpush1.msra.mxu0 %v1040
    %1042 = vmatprep.subr.mxu0 0.0
    %v1043 = vand.u32 %v545, 4294901760
    %v1044 = vsub.f32 %v545, %v1043
    %v1045 = vand.u32 %v1044, 4294901760
    %1046 = vmatpush1.msra.mxu0 %v1045
    %1047 = vmatprep.subr.mxu0 0.0
    %v1048 = vand.u32 %v544, 4294901760
    %v1049 = vsub.f32 %v544, %v1048
    %v1050 = vand.u32 %v1049, 4294901760
    %1051 = vmatpush1.msra.mxu0 %v1050
    %1052 = vmatprep.subr.mxu0 0.0
    %v1053 = vand.u32 %v543, 4294901760
    %v1054 = vsub.f32 %v543, %v1053
    %v1055 = vand.u32 %v1054, 4294901760
    %1056 = vmatpush1.msra.mxu0 %v1055
    %1057 = vmatprep.subr.mxu0 0.0
    %v1058 = vand.u32 %v542, 4294901760
    %v1059 = vsub.f32 %v542, %v1058
    %v1060 = vand.u32 %v1059, 4294901760
    %1061 = vmatpush1.msra.mxu0 %v1060
    %1062 = vmatprep.subr.mxu0 0.0
    %v1063 = vand.u32 %v541, 4294901760
    %v1064 = vsub.f32 %v541, %v1063
    %v1065 = vand.u32 %v1064, 4294901760
    %1066 = vmatpush1.msra.mxu0 %v1065
    %1067 = vmatprep.subr.mxu0 0.0
    %v1068 = vand.u32 %v540, 4294901760
    %v1069 = vsub.f32 %v540, %v1068
    %v1070 = vand.u32 %v1069, 4294901760
    %1071 = vmatpush1.msra.mxu0 %v1070
    %1072 = vmatprep.subr.mxu0 0.0
    %v1073 = vand.u32 %v539, 4294901760
    %v1074 = vsub.f32 %v539, %v1073
    %v1075 = vand.u32 %v1074, 4294901760
    %1076 = vmatpush1.msra.mxu0 %v1075
    %1077 = vmatprep.subr.mxu0 0.0
    %1078 = vmatpush2.msra.mxu0 0.0
    %1079 = vmatprep.subr.mxu0 0.0
    %1080 = vmatpush2.msra.mxu0 0.0
    %1081 = vmatprep.subr.mxu0 0.0
    %1082 = vmatpush2.msra.mxu0 0.0
    %1083 = vmatprep.subr.mxu0 0.0
    %1084 = vmatpush2.msra.mxu0 0.0
    %1085 = vmatprep.subr.mxu0 0.0
    %1086 = vmatpush2.msra.mxu0 0.0
    %1087 = vmatprep.subr.mxu0 0.0
    %1088 = vmatpush2.msra.mxu0 0.0
    %1089 = vmatprep.subr.mxu0 0.0
    %1090 = vmatpush2.msra.mxu0 0.0
    %1091 = vmatprep.subr.mxu0 0.0
    %1092 = vmatpush2.msra.mxu0 0.0
    %1093 = vmatprep.subr.mxu0 0.0
    %1094 = vmatpush2.msra.mxu0 0.0
    %1095 = vmatprep.subr.mxu0 0.0
    %1096 = vmatpush2.msra.mxu0 0.0
    %1097 = vmatprep.subr.mxu0 0.0
    %1098 = vmatpush2.msra.mxu0 0.0
    %1099 = vmatprep.subr.mxu0 0.0
    %1100 = vmatpush2.msra.mxu0 0.0
    %1101 = vmatprep.subr.mxu0 0.0
    %1102 = vmatpush2.msra.mxu0 0.0
    %1103 = vmatprep.subr.mxu0 0.0
    %1104 = vmatpush2.msra.mxu0 0.0
    %1105 = vmatprep.subr.mxu0 0.0
    %1106 = vmatpush2.msra.mxu0 0.0
    %1107 = vmatprep.subr.mxu0 0.0
    %1108 = vmatpush2.msra.mxu0 0.0
    %1109 = vmatprep.mubr.f32.mxu0 0.0
    %v1110 = vand.u32 %v538, 4294901760
    %1111 = vmatmul.mubr.f32.gmra.mxu0 %v1110
    %v1112 = vpop.f32.mrf.mxu0
    %v1113 = vadd.f32 %v994, %v1112
    %v1114 = vpop.f32.mrf.mxu0
    %1115 = vdwg.mxu0
    %1116 = vmatprep.subr.mxu0 0.0
    %v1117 = vand.u32 %v554, 4294901760
    %1118 = vmatpush1.msra.mxu0 %v1117
    %1119 = vmatprep.subr.mxu0 0.0
    %v1120 = vand.u32 %v553, 4294901760
    %1121 = vmatpush1.msra.mxu0 %v1120
    %1122 = vmatprep.subr.mxu0 0.0
    %v1123 = vand.u32 %v552, 4294901760
    %1124 = vmatpush1.msra.mxu0 %v1123
    %1125 = vmatprep.subr.mxu0 0.0
    %v1126 = vand.u32 %v551, 4294901760
    %1127 = vmatpush1.msra.mxu0 %v1126
    %1128 = vmatprep.subr.mxu0 0.0
    %v1129 = vand.u32 %v550, 4294901760
    %1130 = vmatpush1.msra.mxu0 %v1129
    %1131 = vmatprep.subr.mxu0 0.0
    %v1132 = vand.u32 %v549, 4294901760
    %1133 = vmatpush1.msra.mxu0 %v1132
    %1134 = vmatprep.subr.mxu0 0.0
    %v1135 = vand.u32 %v548, 4294901760
    %1136 = vmatpush1.msra.mxu0 %v1135
    %1137 = vmatprep.subr.mxu0 0.0
    %v1138 = vand.u32 %v547, 4294901760
    %1139 = vmatpush1.msra.mxu0 %v1138
    %1140 = vmatprep.subr.mxu0 0.0
    %v1141 = vand.u32 %v546, 4294901760
    %1142 = vmatpush1.msra.mxu0 %v1141
    %1143 = vmatprep.subr.mxu0 0.0
    %v1144 = vand.u32 %v545, 4294901760
    %1145 = vmatpush1.msra.mxu0 %v1144
    %1146 = vmatprep.subr.mxu0 0.0
    %v1147 = vand.u32 %v544, 4294901760
    %1148 = vmatpush1.msra.mxu0 %v1147
    %1149 = vmatprep.subr.mxu0 0.0
    %v1150 = vand.u32 %v543, 4294901760
    %1151 = vmatpush1.msra.mxu0 %v1150
    %1152 = vmatprep.subr.mxu0 0.0
    %v1153 = vand.u32 %v542, 4294901760
    %1154 = vmatpush1.msra.mxu0 %v1153
    %1155 = vmatprep.subr.mxu0 0.0
    %v1156 = vand.u32 %v541, 4294901760
    %1157 = vmatpush1.msra.mxu0 %v1156
    %1158 = vmatprep.subr.mxu0 0.0
    %v1159 = vand.u32 %v540, 4294901760
    %1160 = vmatpush1.msra.mxu0 %v1159
    %1161 = vmatprep.subr.mxu0 0.0
    %v1162 = vand.u32 %v539, 4294901760
    %1163 = vmatpush1.msra.mxu0 %v1162
    %1164 = vmatprep.subr.mxu0 0.0
    %1165 = vmatpush2.msra.mxu0 0.0
    %1166 = vmatprep.subr.mxu0 0.0
    %1167 = vmatpush2.msra.mxu0 0.0
    %1168 = vmatprep.subr.mxu0 0.0
    %1169 = vmatpush2.msra.mxu0 0.0
    %1170 = vmatprep.subr.mxu0 0.0
    %1171 = vmatpush2.msra.mxu0 0.0
    %1172 = vmatprep.subr.mxu0 0.0
    %1173 = vmatpush2.msra.mxu0 0.0
    %1174 = vmatprep.subr.mxu0 0.0
    %1175 = vmatpush2.msra.mxu0 0.0
    %1176 = vmatprep.subr.mxu0 0.0
    %1177 = vmatpush2.msra.mxu0 0.0
    %1178 = vmatprep.subr.mxu0 0.0
    %1179 = vmatpush2.msra.mxu0 0.0
    %1180 = vmatprep.subr.mxu0 0.0
    %1181 = vmatpush2.msra.mxu0 0.0
    %1182 = vmatprep.subr.mxu0 0.0
    %1183 = vmatpush2.msra.mxu0 0.0
    %1184 = vmatprep.subr.mxu0 0.0
    %1185 = vmatpush2.msra.mxu0 0.0
    %1186 = vmatprep.subr.mxu0 0.0
    %1187 = vmatpush2.msra.mxu0 0.0
    %1188 = vmatprep.subr.mxu0 0.0
    %1189 = vmatpush2.msra.mxu0 0.0
    %1190 = vmatprep.subr.mxu0 0.0
    %1191 = vmatpush2.msra.mxu0 0.0
    %1192 = vmatprep.subr.mxu0 0.0
    %1193 = vmatpush2.msra.mxu0 0.0
    %1194 = vmatprep.subr.mxu0 0.0
    %1195 = vmatpush2.msra.mxu0 0.0
    %1196 = vmatprep.mubr.f32.mxu0 0.0
    %v1197 = vand.u32 %v538, 4294901760
    %1198 = vmatmul.mubr.f32.gmra.mxu0 %v1197
    %v1199 = vpop.f32.mrf.mxu0
    %v1200 = vadd.f32 %v1113, %v1199
    %v1201 = vpop.f32.mrf.mxu0
    %1202 = vdwg.mxu0
    %v1203 = vtanh.pop %v1200
    %v1204 = vld [vmem:[#allocation7] sm:$0xff]
    %v1205 = vld [vmem:[#allocation7 + $0x8] sm:$0xff]
    %v1206 = vld [vmem:[#allocation7 + $0x10] sm:$0xff]
    %v1207 = vld [vmem:[#allocation7 + $0x18] sm:$0xff]
    %v1208 = vld [vmem:[#allocation7 + $0x20] sm:$0xff]
    %v1209 = vld [vmem:[#allocation7 + $0x28] sm:$0xff]
    %v1210 = vld [vmem:[#allocation7 + $0x30] sm:$0xff]
    %v1211 = vld [vmem:[#allocation7 + $0x38] sm:$0xff]
    %v1212 = vld [vmem:[#allocation7 + $0x40] sm:$0xff]
    %v1213 = vld [vmem:[#allocation7 + $0x48] sm:$0xff]
    %v1214 = vld [vmem:[#allocation7 + $0x50] sm:$0xff]
    %v1215 = vld [vmem:[#allocation7 + $0x58] sm:$0xff]
    %v1216 = vld [vmem:[#allocation7 + $0x60] sm:$0xff]
    %v1217 = vld [vmem:[#allocation7 + $0x68] sm:$0xff]
    %v1218 = vld [vmem:[#allocation7 + $0x70] sm:$0xff]
    %v1219 = vld [vmem:[#allocation7 + $0x78] sm:$0xff]
    %v1220 = vld [vmem:[%s6] sm:$0x1]
    %v1222 = vlaneseq
    %v1223 = vshrl.u32 %v1222, 7
    %v1224 = vsub.s32 0, %v1223
    %v1225 = vrot.slane %v1220, %v1224
    %1227 = vmatprep.subr.mxu0 0.0
    %v1228 = vand.u32 %v1219, 4294901760
    %1229 = vmatpush1.msra.mxu0 %v1228
    %1230 = vmatprep.subr.mxu0 0.0
    %v1231 = vand.u32 %v1218, 4294901760
    %1232 = vmatpush1.msra.mxu0 %v1231
    %1233 = vmatprep.subr.mxu0 0.0
    %v1234 = vand.u32 %v1217, 4294901760
    %1235 = vmatpush1.msra.mxu0 %v1234
    %1236 = vmatprep.subr.mxu0 0.0
    %v1237 = vand.u32 %v1216, 4294901760
    %1238 = vmatpush1.msra.mxu0 %v1237
    %1239 = vmatprep.subr.mxu0 0.0
    %v1240 = vand.u32 %v1215, 4294901760
    %1241 = vmatpush1.msra.mxu0 %v1240
    %1242 = vmatprep.subr.mxu0 0.0
    %v1243 = vand.u32 %v1214, 4294901760
    %1244 = vmatpush1.msra.mxu0 %v1243
    %1245 = vmatprep.subr.mxu0 0.0
    %v1246 = vand.u32 %v1213, 4294901760
    %1247 = vmatpush1.msra.mxu0 %v1246
    %1248 = vmatprep.subr.mxu0 0.0
    %v1249 = vand.u32 %v1212, 4294901760
    %1250 = vmatpush1.msra.mxu0 %v1249
    %1251 = vmatprep.subr.mxu0 0.0
    %v1252 = vand.u32 %v1211, 4294901760
    %1253 = vmatpush1.msra.mxu0 %v1252
    %1254 = vmatprep.subr.mxu0 0.0
    %v1255 = vand.u32 %v1210, 4294901760
    %1256 = vmatpush1.msra.mxu0 %v1255
    %1257 = vmatprep.subr.mxu0 0.0
    %v1258 = vand.u32 %v1209, 4294901760
    %1259 = vmatpush1.msra.mxu0 %v1258
    %1260 = vmatprep.subr.mxu0 0.0
    %v1261 = vand.u32 %v1208, 4294901760
    %1262 = vmatpush1.msra.mxu0 %v1261
    %1263 = vmatprep.subr.mxu0 0.0
    %v1264 = vand.u32 %v1207, 4294901760
    %1265 = vmatpush1.msra.mxu0 %v1264
    %1266 = vmatprep.subr.mxu0 0.0
    %v1267 = vand.u32 %v1206, 4294901760
    %1268 = vmatpush1.msra.mxu0 %v1267
    %1269 = vmatprep.subr.mxu0 0.0
    %v1270 = vand.u32 %v1205, 4294901760
    %1271 = vmatpush1.msra.mxu0 %v1270
    %1272 = vmatprep.subr.mxu0 0.0
    %v1273 = vand.u32 %v1204, 4294901760
    %1274 = vmatpush1.msra.mxu0 %v1273
    %1275 = vmatprep.subr.mxu0 0.0
    %1276 = vmatpush2.msra.mxu0 0.0
    %1277 = vmatprep.subr.mxu0 0.0
    %1278 = vmatpush2.msra.mxu0 0.0
    %1279 = vmatprep.subr.mxu0 0.0
    %1280 = vmatpush2.msra.mxu0 0.0
    %1281 = vmatprep.subr.mxu0 0.0
    %1282 = vmatpush2.msra.mxu0 0.0
    %1283 = vmatprep.subr.mxu0 0.0
    %1284 = vmatpush2.msra.mxu0 0.0
    %1285 = vmatprep.subr.mxu0 0.0
    %1286 = vmatpush2.msra.mxu0 0.0
    %1287 = vmatprep.subr.mxu0 0.0
    %1288 = vmatpush2.msra.mxu0 0.0
    %1289 = vmatprep.subr.mxu0 0.0
    %1290 = vmatpush2.msra.mxu0 0.0
    %1291 = vmatprep.subr.mxu0 0.0
    %1292 = vmatpush2.msra.mxu0 0.0
    %1293 = vmatprep.subr.mxu0 0.0
    %1294 = vmatpush2.msra.mxu0 0.0
    %1295 = vmatprep.subr.mxu0 0.0
    %1296 = vmatpush2.msra.mxu0 0.0
    %1297 = vmatprep.subr.mxu0 0.0
    %1298 = vmatpush2.msra.mxu0 0.0
    %1299 = vmatprep.subr.mxu0 0.0
    %1300 = vmatpush2.msra.mxu0 0.0
    %1301 = vmatprep.subr.mxu0 0.0
    %1302 = vmatpush2.msra.mxu0 0.0
    %1303 = vmatprep.subr.mxu0 0.0
    %1304 = vmatpush2.msra.mxu0 0.0
    %1305 = vmatprep.subr.mxu0 0.0
    %1306 = vmatpush2.msra.mxu0 0.0
    %1307 = vmatprep.mubr.f32.mxu0 0.0
    %v1308 = vand.u32 %v1203, 4294901760
    %v1309 = vsub.f32 %v1203, %v1308
    %v1310 = vand.u32 %v1309, 4294901760
    %v1311 = vsub.f32 %v1309, %v1310
    %v1312 = vand.u32 %v1311, 4294901760
    %1313 = vmatmul.mubr.f32.gmra.mxu0 %v1312
    %v1314 = vpop.f32.mrf.mxu0
    %v1315 = vadd.f32 %v1225, %v1314
    %v1316 = vpop.f32.mrf.mxu0
    %1317 = vdwg.mxu0
    %1318 = vmatprep.subr.mxu0 0.0
    %v1319 = vand.u32 %v1219, 4294901760
    %v1320 = vsub.f32 %v1219, %v1319
    %v1321 = vand.u32 %v1320, 4294901760
    %v1322 = vsub.f32 %v1320, %v1321
    %v1323 = vand.u32 %v1322, 4294901760
    %1324 = vmatpush1.msra.mxu0 %v1323
    %1325 = vmatprep.subr.mxu0 0.0
    %v1326 = vand.u32 %v1218, 4294901760
    %v1327 = vsub.f32 %v1218, %v1326
    %v1328 = vand.u32 %v1327, 4294901760
    %v1329 = vsub.f32 %v1327, %v1328
    %v1330 = vand.u32 %v1329, 4294901760
    %1331 = vmatpush1.msra.mxu0 %v1330
    %1332 = vmatprep.subr.mxu0 0.0
    %v1333 = vand.u32 %v1217, 4294901760
    %v1334 = vsub.f32 %v1217, %v1333
    %v1335 = vand.u32 %v1334, 4294901760
    %v1336 = vsub.f32 %v1334, %v1335
    %v1337 = vand.u32 %v1336, 4294901760
    %1338 = vmatpush1.msra.mxu0 %v1337
    %1339 = vmatprep.subr.mxu0 0.0
    %v1340 = vand.u32 %v1216, 4294901760
    %v1341 = vsub.f32 %v1216, %v1340
    %v1342 = vand.u32 %v1341, 4294901760
    %v1343 = vsub.f32 %v1341, %v1342
    %v1344 = vand.u32 %v1343, 4294901760
    %1345 = vmatpush1.msra.mxu0 %v1344
    %1346 = vmatprep.subr.mxu0 0.0
    %v1347 = vand.u32 %v1215, 4294901760
    %v1348 = vsub.f32 %v1215, %v1347
    %v1349 = vand.u32 %v1348, 4294901760
    %v1350 = vsub.f32 %v1348, %v1349
    %v1351 = vand.u32 %v1350, 4294901760
    %1352 = vmatpush1.msra.mxu0 %v1351
    %1353 = vmatprep.subr.mxu0 0.0
    %v1354 = vand.u32 %v1214, 4294901760
    %v1355 = vsub.f32 %v1214, %v1354
    %v1356 = vand.u32 %v1355, 4294901760
    %v1357 = vsub.f32 %v1355, %v1356
    %v1358 = vand.u32 %v1357, 4294901760
    %1359 = vmatpush1.msra.mxu0 %v1358
    %1360 = vmatprep.subr.mxu0 0.0
    %v1361 = vand.u32 %v1213, 4294901760
    %v1362 = vsub.f32 %v1213, %v1361
    %v1363 = vand.u32 %v1362, 4294901760
    %v1364 = vsub.f32 %v1362, %v1363
    %v1365 = vand.u32 %v1364, 4294901760
    %1366 = vmatpush1.msra.mxu0 %v1365
    %1367 = vmatprep.subr.mxu0 0.0
    %v1368 = vand.u32 %v1212, 4294901760
    %v1369 = vsub.f32 %v1212, %v1368
    %v1370 = vand.u32 %v1369, 4294901760
    %v1371 = vsub.f32 %v1369, %v1370
    %v1372 = vand.u32 %v1371, 4294901760
    %1373 = vmatpush1.msra.mxu0 %v1372
    %1374 = vmatprep.subr.mxu0 0.0
    %v1375 = vand.u32 %v1211, 4294901760
    %v1376 = vsub.f32 %v1211, %v1375
    %v1377 = vand.u32 %v1376, 4294901760
    %v1378 = vsub.f32 %v1376, %v1377
    %v1379 = vand.u32 %v1378, 4294901760
    %1380 = vmatpush1.msra.mxu0 %v1379
    %1381 = vmatprep.subr.mxu0 0.0
    %v1382 = vand.u32 %v1210, 4294901760
    %v1383 = vsub.f32 %v1210, %v1382
    %v1384 = vand.u32 %v1383, 4294901760
    %v1385 = vsub.f32 %v1383, %v1384
    %v1386 = vand.u32 %v1385, 4294901760
    %1387 = vmatpush1.msra.mxu0 %v1386
    %1388 = vmatprep.subr.mxu0 0.0
    %v1389 = vand.u32 %v1209, 4294901760
    %v1390 = vsub.f32 %v1209, %v1389
    %v1391 = vand.u32 %v1390, 4294901760
    %v1392 = vsub.f32 %v1390, %v1391
    %v1393 = vand.u32 %v1392, 4294901760
    %1394 = vmatpush1.msra.mxu0 %v1393
    %1395 = vmatprep.subr.mxu0 0.0
    %v1396 = vand.u32 %v1208, 4294901760
    %v1397 = vsub.f32 %v1208, %v1396
    %v1398 = vand.u32 %v1397, 4294901760
    %v1399 = vsub.f32 %v1397, %v1398
    %v1400 = vand.u32 %v1399, 4294901760
    %1401 = vmatpush1.msra.mxu0 %v1400
    %1402 = vmatprep.subr.mxu0 0.0
    %v1403 = vand.u32 %v1207, 4294901760
    %v1404 = vsub.f32 %v1207, %v1403
    %v1405 = vand.u32 %v1404, 4294901760
    %v1406 = vsub.f32 %v1404, %v1405
    %v1407 = vand.u32 %v1406, 4294901760
    %1408 = vmatpush1.msra.mxu0 %v1407
    %1409 = vmatprep.subr.mxu0 0.0
    %v1410 = vand.u32 %v1206, 4294901760
    %v1411 = vsub.f32 %v1206, %v1410
    %v1412 = vand.u32 %v1411, 4294901760
    %v1413 = vsub.f32 %v1411, %v1412
    %v1414 = vand.u32 %v1413, 4294901760
    %1415 = vmatpush1.msra.mxu0 %v1414
    %1416 = vmatprep.subr.mxu0 0.0
    %v1417 = vand.u32 %v1205, 4294901760
    %v1418 = vsub.f32 %v1205, %v1417
    %v1419 = vand.u32 %v1418, 4294901760
    %v1420 = vsub.f32 %v1418, %v1419
    %v1421 = vand.u32 %v1420, 4294901760
    %1422 = vmatpush1.msra.mxu0 %v1421
    %1423 = vmatprep.subr.mxu0 0.0
    %v1424 = vand.u32 %v1204, 4294901760
    %v1425 = vsub.f32 %v1204, %v1424
    %v1426 = vand.u32 %v1425, 4294901760
    %v1427 = vsub.f32 %v1425, %v1426
    %v1428 = vand.u32 %v1427, 4294901760
    %1429 = vmatpush1.msra.mxu0 %v1428
    %1430 = vmatprep.subr.mxu0 0.0
    %1431 = vmatpush2.msra.mxu0 0.0
    %1432 = vmatprep.subr.mxu0 0.0
    %1433 = vmatpush2.msra.mxu0 0.0
    %1434 = vmatprep.subr.mxu0 0.0
    %1435 = vmatpush2.msra.mxu0 0.0
    %1436 = vmatprep.subr.mxu0 0.0
    %1437 = vmatpush2.msra.mxu0 0.0
    %1438 = vmatprep.subr.mxu0 0.0
    %1439 = vmatpush2.msra.mxu0 0.0
    %1440 = vmatprep.subr.mxu0 0.0
    %1441 = vmatpush2.msra.mxu0 0.0
    %1442 = vmatprep.subr.mxu0 0.0
    %1443 = vmatpush2.msra.mxu0 0.0
    %1444 = vmatprep.subr.mxu0 0.0
    %1445 = vmatpush2.msra.mxu0 0.0
    %1446 = vmatprep.subr.mxu0 0.0
    %1447 = vmatpush2.msra.mxu0 0.0
    %1448 = vmatprep.subr.mxu0 0.0
    %1449 = vmatpush2.msra.mxu0 0.0
    %1450 = vmatprep.subr.mxu0 0.0
    %1451 = vmatpush2.msra.mxu0 0.0
    %1452 = vmatprep.subr.mxu0 0.0
    %1453 = vmatpush2.msra.mxu0 0.0
    %1454 = vmatprep.subr.mxu0 0.0
    %1455 = vmatpush2.msra.mxu0 0.0
    %1456 = vmatprep.subr.mxu0 0.0
    %1457 = vmatpush2.msra.mxu0 0.0
    %1458 = vmatprep.subr.mxu0 0.0
    %1459 = vmatpush2.msra.mxu0 0.0
    %1460 = vmatprep.subr.mxu0 0.0
    %1461 = vmatpush2.msra.mxu0 0.0
    %1462 = vmatprep.mubr.f32.mxu0 0.0
    %v1463 = vand.u32 %v1203, 4294901760
    %1464 = vmatmul.mubr.f32.gmra.mxu0 %v1463
    %v1465 = vpop.f32.mrf.mxu0
    %v1466 = vadd.f32 %v1315, %v1465
    %v1467 = vpop.f32.mrf.mxu0
    %1468 = vdwg.mxu0
    %1469 = vmatprep.subr.mxu0 0.0
    %v1470 = vand.u32 %v1219, 4294901760
    %v1471 = vsub.f32 %v1219, %v1470
    %1472 = vmatpush1.msra.mxu0 %v1471
    %1473 = vmatprep.subr.mxu0 0.0
    %v1474 = vand.u32 %v1218, 4294901760
    %v1475 = vsub.f32 %v1218, %v1474
    %1476 = vmatpush1.msra.mxu0 %v1475
    %1477 = vmatprep.subr.mxu0 0.0
    %v1478 = vand.u32 %v1217, 4294901760
    %v1479 = vsub.f32 %v1217, %v1478
    %1480 = vmatpush1.msra.mxu0 %v1479
    %1481 = vmatprep.subr.mxu0 0.0
    %v1482 = vand.u32 %v1216, 4294901760
    %v1483 = vsub.f32 %v1216, %v1482
    %1484 = vmatpush1.msra.mxu0 %v1483
    %1485 = vmatprep.subr.mxu0 0.0
    %v1486 = vand.u32 %v1215, 4294901760
    %v1487 = vsub.f32 %v1215, %v1486
    %1488 = vmatpush1.msra.mxu0 %v1487
    %1489 = vmatprep.subr.mxu0 0.0
    %v1490 = vand.u32 %v1214, 4294901760
    %v1491 = vsub.f32 %v1214, %v1490
    %1492 = vmatpush1.msra.mxu0 %v1491
    %1493 = vmatprep.subr.mxu0 0.0
    %v1494 = vand.u32 %v1213, 4294901760
    %v1495 = vsub.f32 %v1213, %v1494
    %1496 = vmatpush1.msra.mxu0 %v1495
    %1497 = vmatprep.subr.mxu0 0.0
    %v1498 = vand.u32 %v1212, 4294901760
    %v1499 = vsub.f32 %v1212, %v1498
    %1500 = vmatpush1.msra.mxu0 %v1499
    %1501 = vmatprep.subr.mxu0 0.0
    %v1502 = vand.u32 %v1211, 4294901760
    %v1503 = vsub.f32 %v1211, %v1502
    %1504 = vmatpush1.msra.mxu0 %v1503
    %1505 = vmatprep.subr.mxu0 0.0
    %v1506 = vand.u32 %v1210, 4294901760
    %v1507 = vsub.f32 %v1210, %v1506
    %1508 = vmatpush1.msra.mxu0 %v1507
    %1509 = vmatprep.subr.mxu0 0.0
    %v1510 = vand.u32 %v1209, 4294901760
    %v1511 = vsub.f32 %v1209, %v1510
    %1512 = vmatpush1.msra.mxu0 %v1511
    %1513 = vmatprep.subr.mxu0 0.0
    %v1514 = vand.u32 %v1208, 4294901760
    %v1515 = vsub.f32 %v1208, %v1514
    %1516 = vmatpush1.msra.mxu0 %v1515
    %1517 = vmatprep.subr.mxu0 0.0
    %v1518 = vand.u32 %v1207, 4294901760
    %v1519 = vsub.f32 %v1207, %v1518
    %1520 = vmatpush1.msra.mxu0 %v1519
    %1521 = vmatprep.subr.mxu0 0.0
    %v1522 = vand.u32 %v1206, 4294901760
    %v1523 = vsub.f32 %v1206, %v1522
    %1524 = vmatpush1.msra.mxu0 %v1523
    %1525 = vmatprep.subr.mxu0 0.0
    %v1526 = vand.u32 %v1205, 4294901760
    %v1527 = vsub.f32 %v1205, %v1526
    %1528 = vmatpush1.msra.mxu0 %v1527
    %1529 = vmatprep.subr.mxu0 0.0
    %v1530 = vand.u32 %v1204, 4294901760
    %v1531 = vsub.f32 %v1204, %v1530
    %1532 = vmatpush1.msra.mxu0 %v1531
    %1533 = vmatprep.subr.mxu0 0.0
    %1534 = vmatpush2.msra.mxu0 0.0
    %1535 = vmatprep.subr.mxu0 0.0
    %1536 = vmatpush2.msra.mxu0 0.0
    %1537 = vmatprep.subr.mxu0 0.0
    %1538 = vmatpush2.msra.mxu0 0.0
    %1539 = vmatprep.subr.mxu0 0.0
    %1540 = vmatpush2.msra.mxu0 0.0
    %1541 = vmatprep.subr.mxu0 0.0
    %1542 = vmatpush2.msra.mxu0 0.0
    %1543 = vmatprep.subr.mxu0 0.0
    %1544 = vmatpush2.msra.mxu0 0.0
    %1545 = vmatprep.subr.mxu0 0.0
    %1546 = vmatpush2.msra.mxu0 0.0
    %1547 = vmatprep.subr.mxu0 0.0
    %1548 = vmatpush2.msra.mxu0 0.0
    %1549 = vmatprep.subr.mxu0 0.0
    %1550 = vmatpush2.msra.mxu0 0.0
    %1551 = vmatprep.subr.mxu0 0.0
    %1552 = vmatpush2.msra.mxu0 0.0
    %1553 = vmatprep.subr.mxu0 0.0
    %1554 = vmatpush2.msra.mxu0 0.0
    %1555 = vmatprep.subr.mxu0 0.0
    %1556 = vmatpush2.msra.mxu0 0.0
    %1557 = vmatprep.subr.mxu0 0.0
    %1558 = vmatpush2.msra.mxu0 0.0
    %1559 = vmatprep.subr.mxu0 0.0
    %1560 = vmatpush2.msra.mxu0 0.0
    %1561 = vmatprep.subr.mxu0 0.0
    %1562 = vmatpush2.msra.mxu0 0.0
    %1563 = vmatprep.subr.mxu0 0.0
    %1564 = vmatpush2.msra.mxu0 0.0
    %1565 = vmatprep.mubr.f32.mxu0 0.0
    %v1566 = vand.u32 %v1203, 4294901760
    %v1567 = vsub.f32 %v1203, %v1566
    %1568 = vmatmul.mubr.f32.gmra.mxu0 %v1567
    %v1569 = vpop.f32.mrf.mxu0
    %v1570 = vadd.f32 %v1466, %v1569
    %v1571 = vpop.f32.mrf.mxu0
    %1572 = vdwg.mxu0
    %1573 = vmatprep.subr.mxu0 0.0
    %v1574 = vand.u32 %v1219, 4294901760
    %1575 = vmatpush1.msra.mxu0 %v1574
    %1576 = vmatprep.subr.mxu0 0.0
    %v1577 = vand.u32 %v1218, 4294901760
    %1578 = vmatpush1.msra.mxu0 %v1577
    %1579 = vmatprep.subr.mxu0 0.0
    %v1580 = vand.u32 %v1217, 4294901760
    %1581 = vmatpush1.msra.mxu0 %v1580
    %1582 = vmatprep.subr.mxu0 0.0
    %v1583 = vand.u32 %v1216, 4294901760
    %1584 = vmatpush1.msra.mxu0 %v1583
    %1585 = vmatprep.subr.mxu0 0.0
    %v1586 = vand.u32 %v1215, 4294901760
    %1587 = vmatpush1.msra.mxu0 %v1586
    %1588 = vmatprep.subr.mxu0 0.0
    %v1589 = vand.u32 %v1214, 4294901760
    %1590 = vmatpush1.msra.mxu0 %v1589
    %1591 = vmatprep.subr.mxu0 0.0
    %v1592 = vand.u32 %v1213, 4294901760
    %1593 = vmatpush1.msra.mxu0 %v1592
    %1594 = vmatprep.subr.mxu0 0.0
    %v1595 = vand.u32 %v1212, 4294901760
    %1596 = vmatpush1.msra.mxu0 %v1595
    %1597 = vmatprep.subr.mxu0 0.0
    %v1598 = vand.u32 %v1211, 4294901760
    %1599 = vmatpush1.msra.mxu0 %v1598
    %1600 = vmatprep.subr.mxu0 0.0
    %v1601 = vand.u32 %v1210, 4294901760
    %1602 = vmatpush1.msra.mxu0 %v1601
    %1603 = vmatprep.subr.mxu0 0.0
    %v1604 = vand.u32 %v1209, 4294901760
    %1605 = vmatpush1.msra.mxu0 %v1604
    %1606 = vmatprep.subr.mxu0 0.0
    %v1607 = vand.u32 %v1208, 4294901760
    %1608 = vmatpush1.msra.mxu0 %v1607
    %1609 = vmatprep.subr.mxu0 0.0
    %v1610 = vand.u32 %v1207, 4294901760
    %1611 = vmatpush1.msra.mxu0 %v1610
    %1612 = vmatprep.subr.mxu0 0.0
    %v1613 = vand.u32 %v1206, 4294901760
    %1614 = vmatpush1.msra.mxu0 %v1613
    %1615 = vmatprep.subr.mxu0 0.0
    %v1616 = vand.u32 %v1205, 4294901760
    %1617 = vmatpush1.msra.mxu0 %v1616
    %1618 = vmatprep.subr.mxu0 0.0
    %v1619 = vand.u32 %v1204, 4294901760
    %1620 = vmatpush1.msra.mxu0 %v1619
    %1621 = vmatprep.subr.mxu0 0.0
    %1622 = vmatpush2.msra.mxu0 0.0
    %1623 = vmatprep.subr.mxu0 0.0
    %1624 = vmatpush2.msra.mxu0 0.0
    %1625 = vmatprep.subr.mxu0 0.0
    %1626 = vmatpush2.msra.mxu0 0.0
    %1627 = vmatprep.subr.mxu0 0.0
    %1628 = vmatpush2.msra.mxu0 0.0
    %1629 = vmatprep.subr.mxu0 0.0
    %1630 = vmatpush2.msra.mxu0 0.0
    %1631 = vmatprep.subr.mxu0 0.0
    %1632 = vmatpush2.msra.mxu0 0.0
    %1633 = vmatprep.subr.mxu0 0.0
    %1634 = vmatpush2.msra.mxu0 0.0
    %1635 = vmatprep.subr.mxu0 0.0
    %1636 = vmatpush2.msra.mxu0 0.0
    %1637 = vmatprep.subr.mxu0 0.0
    %1638 = vmatpush2.msra.mxu0 0.0
    %1639 = vmatprep.subr.mxu0 0.0
    %1640 = vmatpush2.msra.mxu0 0.0
    %1641 = vmatprep.subr.mxu0 0.0
    %1642 = vmatpush2.msra.mxu0 0.0
    %1643 = vmatprep.subr.mxu0 0.0
    %1644 = vmatpush2.msra.mxu0 0.0
    %1645 = vmatprep.subr.mxu0 0.0
    %1646 = vmatpush2.msra.mxu0 0.0
    %1647 = vmatprep.subr.mxu0 0.0
    %1648 = vmatpush2.msra.mxu0 0.0
    %1649 = vmatprep.subr.mxu0 0.0
    %1650 = vmatpush2.msra.mxu0 0.0
    %1651 = vmatprep.subr.mxu0 0.0
    %1652 = vmatpush2.msra.mxu0 0.0
    %1653 = vmatprep.mubr.f32.mxu0 0.0
    %v1654 = vand.u32 %v1203, 4294901760
    %v1655 = vsub.f32 %v1203, %v1654
    %v1656 = vand.u32 %v1655, 4294901760
    %1657 = vmatmul.mubr.f32.gmra.mxu0 %v1656
    %v1658 = vpop.f32.mrf.mxu0
    %v1659 = vadd.f32 %v1570, %v1658
    %v1660 = vpop.f32.mrf.mxu0
    %1661 = vdwg.mxu0
    %1662 = vmatprep.subr.mxu0 0.0
    %v1663 = vand.u32 %v1219, 4294901760
    %v1664 = vsub.f32 %v1219, %v1663
    %v1665 = vand.u32 %v1664, 4294901760
    %1666 = vmatpush1.msra.mxu0 %v1665
    %1667 = vmatprep.subr.mxu0 0.0
    %v1668 = vand.u32 %v1218, 4294901760
    %v1669 = vsub.f32 %v1218, %v1668
    %v1670 = vand.u32 %v1669, 4294901760
    %1671 = vmatpush1.msra.mxu0 %v1670
    %1672 = vmatprep.subr.mxu0 0.0
    %v1673 = vand.u32 %v1217, 4294901760
    %v1674 = vsub.f32 %v1217, %v1673
    %v1675 = vand.u32 %v1674, 4294901760
    %1676 = vmatpush1.msra.mxu0 %v1675
    %1677 = vmatprep.subr.mxu0 0.0
    %v1678 = vand.u32 %v1216, 4294901760
    %v1679 = vsub.f32 %v1216, %v1678
    %v1680 = vand.u32 %v1679, 4294901760
    %1681 = vmatpush1.msra.mxu0 %v1680
    %1682 = vmatprep.subr.mxu0 0.0
    %v1683 = vand.u32 %v1215, 4294901760
    %v1684 = vsub.f32 %v1215, %v1683
    %v1685 = vand.u32 %v1684, 4294901760
    %1686 = vmatpush1.msra.mxu0 %v1685
    %1687 = vmatprep.subr.mxu0 0.0
    %v1688 = vand.u32 %v1214, 4294901760
    %v1689 = vsub.f32 %v1214, %v1688
    %v1690 = vand.u32 %v1689, 4294901760
    %1691 = vmatpush1.msra.mxu0 %v1690
    %1692 = vmatprep.subr.mxu0 0.0
    %v1693 = vand.u32 %v1213, 4294901760
    %v1694 = vsub.f32 %v1213, %v1693
    %v1695 = vand.u32 %v1694, 4294901760
    %1696 = vmatpush1.msra.mxu0 %v1695
    %1697 = vmatprep.subr.mxu0 0.0
    %v1698 = vand.u32 %v1212, 4294901760
    %v1699 = vsub.f32 %v1212, %v1698
    %v1700 = vand.u32 %v1699, 4294901760
    %1701 = vmatpush1.msra.mxu0 %v1700
    %1702 = vmatprep.subr.mxu0 0.0
    %v1703 = vand.u32 %v1211, 4294901760
    %v1704 = vsub.f32 %v1211, %v1703
    %v1705 = vand.u32 %v1704, 4294901760
    %1706 = vmatpush1.msra.mxu0 %v1705
    %1707 = vmatprep.subr.mxu0 0.0
    %v1708 = vand.u32 %v1210, 4294901760
    %v1709 = vsub.f32 %v1210, %v1708
    %v1710 = vand.u32 %v1709, 4294901760
    %1711 = vmatpush1.msra.mxu0 %v1710
    %1712 = vmatprep.subr.mxu0 0.0
    %v1713 = vand.u32 %v1209, 4294901760
    %v1714 = vsub.f32 %v1209, %v1713
    %v1715 = vand.u32 %v1714, 4294901760
    %1716 = vmatpush1.msra.mxu0 %v1715
    %1717 = vmatprep.subr.mxu0 0.0
    %v1718 = vand.u32 %v1208, 4294901760
    %v1719 = vsub.f32 %v1208, %v1718
    %v1720 = vand.u32 %v1719, 4294901760
    %1721 = vmatpush1.msra.mxu0 %v1720
    %1722 = vmatprep.subr.mxu0 0.0
    %v1723 = vand.u32 %v1207, 4294901760
    %v1724 = vsub.f32 %v1207, %v1723
    %v1725 = vand.u32 %v1724, 4294901760
    %1726 = vmatpush1.msra.mxu0 %v1725
    %1727 = vmatprep.subr.mxu0 0.0
    %v1728 = vand.u32 %v1206, 4294901760
    %v1729 = vsub.f32 %v1206, %v1728
    %v1730 = vand.u32 %v1729, 4294901760
    %1731 = vmatpush1.msra.mxu0 %v1730
    %1732 = vmatprep.subr.mxu0 0.0
    %v1733 = vand.u32 %v1205, 4294901760
    %v1734 = vsub.f32 %v1205, %v1733
    %v1735 = vand.u32 %v1734, 4294901760
    %1736 = vmatpush1.msra.mxu0 %v1735
    %1737 = vmatprep.subr.mxu0 0.0
    %v1738 = vand.u32 %v1204, 4294901760
    %v1739 = vsub.f32 %v1204, %v1738
    %v1740 = vand.u32 %v1739, 4294901760
    %1741 = vmatpush1.msra.mxu0 %v1740
    %1742 = vmatprep.subr.mxu0 0.0
    %1743 = vmatpush2.msra.mxu0 0.0
    %1744 = vmatprep.subr.mxu0 0.0
    %1745 = vmatpush2.msra.mxu0 0.0
    %1746 = vmatprep.subr.mxu0 0.0
    %1747 = vmatpush2.msra.mxu0 0.0
    %1748 = vmatprep.subr.mxu0 0.0
    %1749 = vmatpush2.msra.mxu0 0.0
    %1750 = vmatprep.subr.mxu0 0.0
    %1751 = vmatpush2.msra.mxu0 0.0
    %1752 = vmatprep.subr.mxu0 0.0
    %1753 = vmatpush2.msra.mxu0 0.0
    %1754 = vmatprep.subr.mxu0 0.0
    %1755 = vmatpush2.msra.mxu0 0.0
    %1756 = vmatprep.subr.mxu0 0.0
    %1757 = vmatpush2.msra.mxu0 0.0
    %1758 = vmatprep.subr.mxu0 0.0
    %1759 = vmatpush2.msra.mxu0 0.0
    %1760 = vmatprep.subr.mxu0 0.0
    %1761 = vmatpush2.msra.mxu0 0.0
    %1762 = vmatprep.subr.mxu0 0.0
    %1763 = vmatpush2.msra.mxu0 0.0
    %1764 = vmatprep.subr.mxu0 0.0
    %1765 = vmatpush2.msra.mxu0 0.0
    %1766 = vmatprep.subr.mxu0 0.0
    %1767 = vmatpush2.msra.mxu0 0.0
    %1768 = vmatprep.subr.mxu0 0.0
    %1769 = vmatpush2.msra.mxu0 0.0
    %1770 = vmatprep.subr.mxu0 0.0
    %1771 = vmatpush2.msra.mxu0 0.0
    %1772 = vmatprep.subr.mxu0 0.0
    %1773 = vmatpush2.msra.mxu0 0.0
    %1774 = vmatprep.mubr.f32.mxu0 0.0
    %v1775 = vand.u32 %v1203, 4294901760
    %1776 = vmatmul.mubr.f32.gmra.mxu0 %v1775
    %v1777 = vpop.f32.mrf.mxu0
    %v1778 = vadd.f32 %v1659, %v1777
    %v1779 = vpop.f32.mrf.mxu0
    %1780 = vdwg.mxu0
    %1781 = vmatprep.subr.mxu0 0.0
    %v1782 = vand.u32 %v1219, 4294901760
    %1783 = vmatpush1.msra.mxu0 %v1782
    %1784 = vmatprep.subr.mxu0 0.0
    %v1785 = vand.u32 %v1218, 4294901760
    %1786 = vmatpush1.msra.mxu0 %v1785
    %1787 = vmatprep.subr.mxu0 0.0
    %v1788 = vand.u32 %v1217, 4294901760
    %1789 = vmatpush1.msra.mxu0 %v1788
    %1790 = vmatprep.subr.mxu0 0.0
    %v1791 = vand.u32 %v1216, 4294901760
    %1792 = vmatpush1.msra.mxu0 %v1791
    %1793 = vmatprep.subr.mxu0 0.0
    %v1794 = vand.u32 %v1215, 4294901760
    %1795 = vmatpush1.msra.mxu0 %v1794
    %1796 = vmatprep.subr.mxu0 0.0
    %v1797 = vand.u32 %v1214, 4294901760
    %1798 = vmatpush1.msra.mxu0 %v1797
    %1799 = vmatprep.subr.mxu0 0.0
    %v1800 = vand.u32 %v1213, 4294901760
    %1801 = vmatpush1.msra.mxu0 %v1800
    %1802 = vmatprep.subr.mxu0 0.0
    %v1803 = vand.u32 %v1212, 4294901760
    %1804 = vmatpush1.msra.mxu0 %v1803
    %1805 = vmatprep.subr.mxu0 0.0
    %v1806 = vand.u32 %v1211, 4294901760
    %1807 = vmatpush1.msra.mxu0 %v1806
    %1808 = vmatprep.subr.mxu0 0.0
    %v1809 = vand.u32 %v1210, 4294901760
    %1810 = vmatpush1.msra.mxu0 %v1809
    %1811 = vmatprep.subr.mxu0 0.0
    %v1812 = vand.u32 %v1209, 4294901760
    %1813 = vmatpush1.msra.mxu0 %v1812
    %1814 = vmatprep.subr.mxu0 0.0
    %v1815 = vand.u32 %v1208, 4294901760
    %1816 = vmatpush1.msra.mxu0 %v1815
    %1817 = vmatprep.subr.mxu0 0.0
    %v1818 = vand.u32 %v1207, 4294901760
    %1819 = vmatpush1.msra.mxu0 %v1818
    %1820 = vmatprep.subr.mxu0 0.0
    %v1821 = vand.u32 %v1206, 4294901760
    %1822 = vmatpush1.msra.mxu0 %v1821
    %1823 = vmatprep.subr.mxu0 0.0
    %v1824 = vand.u32 %v1205, 4294901760
    %1825 = vmatpush1.msra.mxu0 %v1824
    %1826 = vmatprep.subr.mxu0 0.0
    %v1827 = vand.u32 %v1204, 4294901760
    %1828 = vmatpush1.msra.mxu0 %v1827
    %1829 = vmatprep.subr.mxu0 0.0
    %1830 = vmatpush2.msra.mxu0 0.0
    %1831 = vmatprep.subr.mxu0 0.0
    %1832 = vmatpush2.msra.mxu0 0.0
    %1833 = vmatprep.subr.mxu0 0.0
    %1834 = vmatpush2.msra.mxu0 0.0
    %1835 = vmatprep.subr.mxu0 0.0
    %1836 = vmatpush2.msra.mxu0 0.0
    %1837 = vmatprep.subr.mxu0 0.0
    %1838 = vmatpush2.msra.mxu0 0.0
    %1839 = vmatprep.subr.mxu0 0.0
    %1840 = vmatpush2.msra.mxu0 0.0
    %1841 = vmatprep.subr.mxu0 0.0
    %1842 = vmatpush2.msra.mxu0 0.0
    %1843 = vmatprep.subr.mxu0 0.0
    %1844 = vmatpush2.msra.mxu0 0.0
    %1845 = vmatprep.subr.mxu0 0.0
    %1846 = vmatpush2.msra.mxu0 0.0
    %1847 = vmatprep.subr.mxu0 0.0
    %1848 = vmatpush2.msra.mxu0 0.0
    %1849 = vmatprep.subr.mxu0 0.0
    %1850 = vmatpush2.msra.mxu0 0.0
    %1851 = vmatprep.subr.mxu0 0.0
    %1852 = vmatpush2.msra.mxu0 0.0
    %1853 = vmatprep.subr.mxu0 0.0
    %1854 = vmatpush2.msra.mxu0 0.0
    %1855 = vmatprep.subr.mxu0 0.0
    %1856 = vmatpush2.msra.mxu0 0.0
    %1857 = vmatprep.subr.mxu0 0.0
    %1858 = vmatpush2.msra.mxu0 0.0
    %1859 = vmatprep.subr.mxu0 0.0
    %1860 = vmatpush2.msra.mxu0 0.0
    %1861 = vmatprep.mubr.f32.mxu0 0.0
    %v1862 = vand.u32 %v1203, 4294901760
    %1863 = vmatmul.mubr.f32.gmra.mxu0 %v1862
    %v1864 = vpop.f32.mrf.mxu0
    %v1865 = vadd.f32 %v1778, %v1864
    %v1866 = vpop.f32.mrf.mxu0
    %1867 = vdwg.mxu0
    %vm1868 = vcmask 31744
    %1869 = vst.msk [vmem:[%s7] sm:$0xff] %vm1868, %v1865
    %v1870 = vlaneseq
    %v1871 = vand.u32 %v1870, 127
    %vm1872 = vcmp.lt.s32.totalorder %v1871, 4
    %v1873 = vsel %vm1872, %v1865, -inf
    %1874 = vmax.xlane.f32.xlu0 %v1873
    %v1875 = vpop.xlane.xlu0 %1874
    %vm1876 = vcmp.ge.f32.partialorder %v1873, %v1875
    %v1877 = vsel %vm1876, %v1871, 128
    %v1878 = vand.u32 %v1877, 65535
    %v1879 = vshra.s32 %v1877, 16
    %v1880 = vcvt.s32.f32 %v1878
    %v1881 = vcvt.s32.f32 %v1879
    %1882 = vmin.xlane.f32.xlu0 %v1881
    %v1883 = vpop.xlane.xlu0 %1882
    %vm1884 = vcmp.eq.f32.partialorder %v1881, %v1883
    %v1885 = vsel %vm1884, %v1880, inf
    %1886 = vmin.xlane.f32.xlu0 %v1885
    %v1887 = vpop.xlane.xlu0 %1886
    %v1888 = vcvt.f32.s32 %v1887
    %v1889 = vcvt.f32.s32 %v1883
    %v1890 = vshll.u32 %v1889, 16
    %v1891 = vadd.s32 %v1890, %v1888
    %vm1892 = vcmask 7168
    %1893 = vst.msk [vmem:[%s8] sm:$0xff] %vm1892, %v1891
    // Predicated region
    $region46: #{tpu_custom_call.1} parent=1 // pred_check
      _
    $region47: #{tpu_custom_call.1} parent=1 // pred_check_branch
      %1895 = sbr.rel (0) target = $region49
    $region48: #{tpu_custom_call.1} parent=1 // pred_region
      _
    $region49: #{tpu_custom_call.1} parent=1 // pred_fallthru
      _
    // Predicated region
    $region50: #{tpu_custom_call.1} parent=1 // pred_check
      _
    $region51: #{tpu_custom_call.1} parent=1 // pred_check_branch
      %1897 = sbr.rel (0) target = $region53
    $region52: #{tpu_custom_call.1} parent=1 // pred_region
      _
    $region53: #{tpu_custom_call.1} parent=1 // pred_fallthru
      _
    // Predicated region
    $region54: #{tpu_custom_call.1} parent=1 // pred_check
      _
    $region55: #{tpu_custom_call.1} parent=1 // pred_check_branch
      %1899 = sbr.rel (0) target = $region57
    $region56: #{tpu_custom_call.1} parent=1 // pred_region
      _
    $region57: #{tpu_custom_call.1} parent=1 // pred_fallthru
      _
    // Predicated region
    $region58: #{tpu_custom_call.1} parent=1 // pred_check
      _
    $region59: #{tpu_custom_call.1} parent=1 // pred_check_branch
      %1901 = sbr.rel (0) target = $region61
    $region60: #{tpu_custom_call.1} parent=1 // pred_region
      _
    $region61: #{tpu_custom_call.1} parent=1 // pred_fallthru
      _
    %1902 = vsyncpa [#allocation3], 1
    %1903 = vsyncpa [#allocation5], 1
    %1904 = vsyncpa [#allocation8], 1

</llo_original>
